<compile_context>
chip_gen: v7x
topology: tpu7x:2x2x1
jax: 0.10.0
libtpu: 0.0.40
codegen_flags: <defaults>
</compile_context>

<pallas_src>
from functools import partial

import jax
import jax.numpy as jnp
from jax.experimental import pallas as pl
from jax.experimental.pallas import tpu as pltpu


def _round_up(x, m):
    return ((x + m - 1) // m) * m


def _tile_plan(n):
    """(n_pad, tm, tk): padded node count + row / contraction tile sizes."""
    if n <= 512:
        n_pad = _round_up(n, 128)        # lane-dense single tile
        return n_pad, n_pad, n_pad
    tm = tk = 512                         # 512x512 bf16 A tiles (512 KiB each)
    n_pad = _round_up(n, 2 * tm)          # even grid[0] -> both v7x TCs busy
    return n_pad, tm, tk


def _tiles_from_padded(n_pad):
    """Re-derive (tm, tk) from an already-padded node count."""
    if n_pad <= 512:
        return n_pad, n_pad
    return 512, 512


# ----------------------------- Pallas kernels ------------------------------ #
def _gcn_layer1_kernel(a_ref, xw_ref, b_ref, w2_ref, o_ref, acc_ref):
    """Layer-1 tile step: acc += A[i,k] @ (X@W1)[k].

    Finalize epilogue: H1 = ReLU(acc + b1); store H1 @ W2 (bf16) so the second
    pass is also a pure A-aggregation. BN is pre-folded into W/b; Dropout is
    identity (eval mode). f32 VMEM accumulation, bf16 MXU operands.
    """
    k = pl.program_id(1)

    @pl.when(k == 0)
    def _():
        acc_ref[...] = jnp.zeros_like(acc_ref)

    acc_ref[...] += jnp.dot(a_ref[...], xw_ref[...],
                            preferred_element_type=jnp.float32)

    @pl.when(k == pl.num_programs(1) - 1)
    def _():
        h1 = jnp.maximum(acc_ref[...] + b_ref[...], 0.0)
        o_ref[...] = jnp.dot(h1.astype(w2_ref.dtype), w2_ref[...],
                             preferred_element_type=jnp.float32
                             ).astype(o_ref.dtype)


def _gcn_head_kernel(a_ref, hw_ref, b_ref, wc_ref, bc_ref, o_ref, acc_ref):
    """Layer-2 aggregation fused with Linear head + log_softmax epilogue."""
    k = pl.program_id(1)

    @pl.when(k == 0)
    def _():
        acc_ref[...] = jnp.zeros_like(acc_ref)

    acc_ref[...] += jnp.dot(a_ref[...], hw_ref[...],
                            preferred_element_type=jnp.float32)

    @pl.when(k == pl.num_programs(1) - 1)
    def _():
        h2 = jnp.maximum(acc_ref[...] + b_ref[...], 0.0)
        # Logits stay f32: padded class columns carry a -1e30 bias so exp()
        # underflows to 0 and they vanish from the log_softmax normalizer.
        logits = jnp.dot(h2.astype(wc_ref.dtype), wc_ref[...],
                         preferred_element_type=jnp.float32) + bc_ref[...]
        m = jnp.max(logits, axis=-1, keepdims=True)
        z = logits - m
        lse = jnp.log(jnp.sum(jnp.exp(z), axis=-1, keepdims=True))
        o_ref[...] = (z - lse).astype(o_ref.dtype)


# ------------------------------ pallas_call wrappers ------------------------ #
def _gcn_layer1(a, xw, b1, w2, *, tm, tk):
    n_pad, h = xw.shape
    grid = (n_pad // tm, n_pad // tk)
    cost = pl.CostEstimate(
        flops=2 * n_pad * n_pad * h + 2 * n_pad * h * h,
        transcendentals=0,
        bytes_accessed=(a.size * a.dtype.itemsize
                        + grid[0] * xw.size * xw.dtype.itemsize
                        + w2.size * w2.dtype.itemsize
                        + n_pad * h * 2),
    )
    return pl.pallas_call(
        _gcn_layer1_kernel,
        out_shape=jax.ShapeDtypeStruct((n_pad, h), jnp.bfloat16),
        grid_spec=pltpu.PrefetchScalarGridSpec(
            num_scalar_prefetch=0,
            grid=grid,
            in_specs=[
                pl.BlockSpec((tm, tk), lambda i, k: (i, k)),   # A tile (stream)
                pl.BlockSpec((tk, h), lambda i, k: (k, 0)),    # XW1 rows
                pl.BlockSpec((1, h), lambda i, k: (0, 0)),     # b1 (BN-folded)
                pl.BlockSpec((h, h), lambda i, k: (0, 0)),     # W2 (BN-folded)
            ],
            out_specs=pl.BlockSpec((tm, h), lambda i, k: (i, 0)),
            scratch_shapes=[pltpu.VMEM((tm, h), jnp.float32)],
        ),
        compiler_params=pltpu.CompilerParams(
            dimension_semantics=("parallel", "arbitrary")),
        cost_estimate=cost,
    )(a, xw, b1, w2)


def _gcn_head(a, hw, b2, wc, bc, *, tm, tk):
    n_pad, h = hw.shape
    c = wc.shape[1]
    grid = (n_pad // tm, n_pad // tk)
    cost = pl.CostEstimate(
        flops=2 * n_pad * n_pad * h + 2 * n_pad * h * c,
        transcendentals=n_pad * c,
        bytes_accessed=(a.size * a.dtype.itemsize
                        + grid[0] * hw.size * hw.dtype.itemsize
                        + wc.size * wc.dtype.itemsize
                        + n_pad * c * 4),
    )
    return pl.pallas_call(
        _gcn_head_kernel,
        out_shape=jax.ShapeDtypeStruct((n_pad, c), jnp.float32),
        grid_spec=pltpu.PrefetchScalarGridSpec(
            num_scalar_prefetch=0,
            grid=grid,
            in_specs=[
                pl.BlockSpec((tm, tk), lambda i, k: (i, k)),   # A tile (stream)
                pl.BlockSpec((tk, h), lambda i, k: (k, 0)),    # H1@W2 rows
                pl.BlockSpec((1, h), lambda i, k: (0, 0)),     # b2 (BN-folded)
                pl.BlockSpec((h, c), lambda i, k: (0, 0)),     # classifier W
                pl.BlockSpec((1, c), lambda i, k: (0, 0)),     # classifier b
            ],
            out_specs=pl.BlockSpec((tm, c), lambda i, k: (i, 0)),
            scratch_shapes=[pltpu.VMEM((tm, h), jnp.float32)],
        ),
        compiler_params=pltpu.CompilerParams(
            dimension_semantics=("parallel", "arbitrary")),
        cost_estimate=cost,
    )(a, hw, b2, wc, bc)


# --------------------------- host-side (one-time) prep ---------------------- #
def fold_and_pad_params(params, eps=1e-5):
    """Fold eval-mode BN into GCN (W, b); pad dims to 128; cast weights to bf16.

    Called ONCE (outside the jitted forward) — parameters are fixed per model.
    """
    d, h = params["w1"].shape
    c = params["wc"].shape[1]
    d_pad = _round_up(d, 128)
    h_pad = _round_up(h, 128)
    c_pad = _round_up(c, 128)

    def fold(w, b, gamma, beta, mean, var):
        s = gamma / jnp.sqrt(var + eps)      # BN scale
        t = beta - mean * s                  # BN shift
        return w * s[None, :], b * s + t     # exact: diag scale commutes with A@()

    w1, b1 = fold(params["w1"], params["b1"], params["g1"], params["beta1"],
                  params["m1"], params["v1"])
    w2, b2 = fold(params["w2"], params["b2"], params["g2"], params["beta2"],
                  params["m2"], params["v2"])
    wc, bc = params["wc"], params["bc"]

    def pad2(m_, rows, cols, fill=0.0):
        return jnp.pad(m_, ((0, rows - m_.shape[0]), (0, cols - m_.shape[1])),
                       constant_values=fill)

    return {
        "w1": pad2(w1, d_pad, h_pad).astype(jnp.bfloat16),
        "b1": pad2(b1[None, :], 1, h_pad),                      # f32
        "w2": pad2(w2, h_pad, h_pad).astype(jnp.bfloat16),
        "b2": pad2(b2[None, :], 1, h_pad),                      # f32
        "wc": pad2(wc, h_pad, c_pad).astype(jnp.bfloat16),
        "bc": pad2(bc[None, :], 1, c_pad, fill=-1e30),          # f32, pads masked
    }


def prepare_adjacency(a_hat):
    """Pad A_hat to the tiled node count and cast to bf16 ONCE per graph.

    Hoisted out of the per-forward jit: the pad+convert touches ~6*N^2 bytes
    of HBM, ~1.5x the kernels' own A traffic, so it must not run every call.
    """
    n = a_hat.shape[0]
    n_pad, _, _ = _tile_plan(n)
    return jnp.pad(a_hat, ((0, n_pad - n), (0, n_pad - n))).astype(jnp.bfloat16)


# --------------------------------- forward ---------------------------------- #
@partial(jax.jit, static_argnames=("out_dim",))
def base_gnn_forward(a_pad, x, folded, *, out_dim):
    """BaseGNN eval-mode forward: XW precompute + two fused pallas_calls."""
    n, d = x.shape
    n_pad = a_pad.shape[0]
    tm, tk = _tiles_from_padded(n_pad)
    d_pad = folded["w1"].shape[0]

    x_pad = jnp.pad(x, ((0, n_pad - n), (0, d_pad - d))).astype(jnp.bfloat16)
    # Hoisted feature projection: computed once per forward (not once per
    # (i,k) grid step inside the kernel), stored bf16 for the MXU.
    xw1 = jnp.dot(x_pad, folded["w1"],
                  preferred_element_type=jnp.float32).astype(jnp.bfloat16)

    h1w2 = _gcn_layer1(a_pad, xw1, folded["b1"], folded["w2"], tm=tm, tk=tk)
    out = _gcn_head(a_pad, h1w2, folded["b2"], folded["wc"], folded["bc"],
                    tm=tm, tk=tk)
    return out[:n, :out_dim]


# ------------------------------- glue (JAX) --------------------------------- #
def build_normalized_adjacency(edge_index, num_nodes):
    """Dense D^-1/2 (A + I) D^-1/2 from a PyG-style edge_index [2, E]."""
    src, dst = edge_index[0], edge_index[1]
    loop = jnp.arange(num_nodes, dtype=edge_index.dtype)
    src = jnp.concatenate([src, loop])
    dst = jnp.concatenate([dst, loop])
    deg = jnp.zeros((num_nodes,), jnp.float32).at[dst].add(1.0)
    dinv = jnp.where(deg > 0, 1.0 / jnp.sqrt(deg), 0.0)
    vals = dinv[dst] * dinv[src]
    a_hat = jnp.zeros((num_nodes, num_nodes), jnp.float32).at[dst, src].add(vals)
    return a_hat


def init_params(key, node_dim, hidden_dim, out_dim):
    """Deterministic synthetic parameters (PyTorch-default-like BN state)."""
    k1, k2, k3 = jax.random.split(key, 3)

    def winit(k, shape):
        return jax.random.normal(k, shape, jnp.float32) / jnp.sqrt(shape[0])

    zeros = lambda m: jnp.zeros((m,), jnp.float32)
    ones = lambda m: jnp.ones((m,), jnp.float32)
    return {
        "w1": winit(k1, (node_dim, hidden_dim)), "b1": zeros(hidden_dim),
        "g1": ones(hidden_dim), "beta1": zeros(hidden_dim),
        "m1": zeros(hidden_dim), "v1": ones(hidden_dim),
        "w2": winit(k2, (hidden_dim, hidden_dim)), "b2": zeros(hidden_dim),
        "g2": ones(hidden_dim), "beta2": zeros(hidden_dim),
        "m2": zeros(hidden_dim), "v2": ones(hidden_dim),
        "wc": winit(k3, (hidden_dim, out_dim)), "bc": zeros(out_dim),
    }


def reference_forward(a_hat, x, params, eps=1e-5):
    """Pure-JAX f32 reference (eval mode: running-stat BN, dropout identity)."""
    def bn(h, g, b, m, v):
        return (h - m) / jnp.sqrt(v + eps) * g + b

    h = a_hat @ (x @ params["w1"]) + params["b1"]
    h = jnp.maximum(bn(h, params["g1"], params["beta1"], params["m1"], params["v1"]), 0.0)
    h = a_hat @ (h @ params["w2"]) + params["b2"]
    h = jnp.maximum(bn(h, params["g2"], params["beta2"], params["m2"], params["v2"]), 0.0)
    logits = h @ params["wc"] + params["bc"]
    return jax.nn.log_softmax(logits, axis=1)


# ---------------------------------- main ------------------------------------ #
if __name__ == "__main__":
    NUM_NODES, NODE_DIM, HIDDEN_DIM, OUT_DIM, NUM_EDGES = 16, 8, 32, 4, 40

    key = jax.random.PRNGKey(0)
    kx, ke, kp = jax.random.split(key, 3)

    x = jax.random.normal(kx, (NUM_NODES, NODE_DIM), jnp.float32)
    edge_index = jax.random.randint(ke, (2, NUM_EDGES), 0, NUM_NODES, jnp.int32)

    a_hat = build_normalized_adjacency(edge_index, NUM_NODES)
    params = init_params(kp, NODE_DIM, HIDDEN_DIM, OUT_DIM)

    # One-time host-side prep, hoisted out of the per-forward jit.
    folded = fold_and_pad_params(params)
    a_pad = prepare_adjacency(a_hat)

    out = jax.block_until_ready(
        base_gnn_forward(a_pad, x, folded, out_dim=OUT_DIM))

    # sanity: shape, log_softmax rows sum (in prob space) to ~1, close to f32 ref
    assert out.shape == (NUM_NODES, OUT_DIM)
    row_sums = jnp.sum(jnp.exp(out), axis=1)
    assert bool(jnp.all(jnp.abs(row_sums - 1.0) < 1e-3))

    ref = reference_forward(a_hat, x, params)
    assert bool(jnp.max(jnp.abs(out - ref)) < 0.2), "mismatch vs f32 reference (bf16 tol)"

    print("KERNEL_OK")
</pallas_src>

<mosaic_0001>
module attributes {stable_mosaic.version = 11 : i64} {
  func.func @_gcn_head_kernel(%arg0: i32, %arg1: i32, %arg2: memref<128x128xbf16, #tpu.memory_space<vmem>>, %arg3: memref<128x128xbf16, #tpu.memory_space<vmem>>, %arg4: memref<1x128xf32, #tpu.memory_space<vmem>>, %arg5: memref<128x128xbf16, #tpu.memory_space<vmem>>, %arg6: memref<1x128xf32, #tpu.memory_space<vmem>>, %arg7: memref<128x128xf32, #tpu.memory_space<vmem>>, %arg8: memref<128x128xf32, #tpu.memory_space<vmem>>) attributes {dimension_semantics = [#tpu.dimension_semantics<parallel>, #tpu.dimension_semantics<arbitrary>], iteration_bounds = array<i64: 1, 1>, scalar_prefetch = 0 : i64, scratch_operands = 1 : i64, tpu.core_type = #tpu.core_type<tc>, window_params = [{transform_indices = @transform_0, window_bounds = array<i64: 128, 128>}, {transform_indices = @transform_1, window_bounds = array<i64: 128, 128>}, {pipeline_mode = #tpu.pipeline_mode<synchronous>, transform_indices = @transform_2, window_bounds = array<i64: 1, 128>}, {pipeline_mode = #tpu.pipeline_mode<synchronous>, transform_indices = @transform_3, window_bounds = array<i64: 128, 128>}, {pipeline_mode = #tpu.pipeline_mode<synchronous>, transform_indices = @transform_4, window_bounds = array<i64: 1, 128>}, {transform_indices = @transform_5, window_bounds = array<i64: 128, 128>}]} {
    %c0_i32 = arith.constant 0 : i32
    %0 = arith.cmpi eq, %arg1, %c0_i32 : i32
    %1 = arith.extui %0 : i1 to i32
    %c0_i32_0 = arith.constant 0 : i32
    %2 = arith.cmpi ne, %1, %c0_i32_0 : i32
    scf.if %2 {
      %cst_10 = arith.constant 0.000000e+00 : f32
      %12 = vector.broadcast %cst_10 : f32 to vector<128x128xf32>
      %c0_11 = arith.constant 0 : index
      %c0_12 = arith.constant 0 : index
      %13 = vector.load %arg8[%c0_11, %c0_12] : memref<128x128xf32, #tpu.memory_space<vmem>>, vector<128x128xf32>
      tpu.vector_store %arg8[%c0_11, %c0_12], %12 {strides = array<i32>} : memref<128x128xf32, #tpu.memory_space<vmem>>, vector<128x128xf32>,
    } else {
    }
    %c0 = arith.constant 0 : index
    %c0_1 = arith.constant 0 : index
    %3 = vector.load %arg8[%c0, %c0_1] : memref<128x128xf32, #tpu.memory_space<vmem>>, vector<128x128xf32>
    %c0_2 = arith.constant 0 : index
    %c0_3 = arith.constant 0 : index
    %4 = vector.load %arg2[%c0_2, %c0_3] : memref<128x128xbf16, #tpu.memory_space<vmem>>, vector<128x128xbf16>
    %c0_4 = arith.constant 0 : index
    %c0_5 = arith.constant 0 : index
    %5 = vector.load %arg3[%c0_4, %c0_5] : memref<128x128xbf16, #tpu.memory_space<vmem>>, vector<128x128xbf16>
    %cst = arith.constant dense<0.000000e+00> : vector<128x128xf32>
    %6 = tpu.matmul %4, %5, %cst {dimension_numbers = #tpu.dot_dimension_numbers<[1], [0], [0], [1], [0, 0, 1, 1], [], []>} : vector<128x128xbf16>, vector<128x128xbf16>, vector<128x128xf32> -> vector<128x128xf32>
    %7 = arith.addf %3, %6 : vector<128x128xf32>
    %c0_6 = arith.constant 0 : index
    %c0_7 = arith.constant 0 : index
    %8 = vector.load %arg8[%c0_6, %c0_7] : memref<128x128xf32, #tpu.memory_space<vmem>>, vector<128x128xf32>
    tpu.vector_store %arg8[%c0_6, %c0_7], %7 {strides = array<i32>} : memref<128x128xf32, #tpu.memory_space<vmem>>, vector<128x128xf32>,
    %c0_i32_8 = arith.constant 0 : i32
    %9 = arith.cmpi eq, %arg1, %c0_i32_8 : i32
    %10 = arith.extui %9 : i1 to i32
    %c0_i32_9 = arith.constant 0 : i32
    %11 = arith.cmpi ne, %10, %c0_i32_9 : i32
    scf.if %11 {
      %c0_10 = arith.constant 0 : index
      %c0_11 = arith.constant 0 : index
      %12 = vector.load %arg8[%c0_10, %c0_11] : memref<128x128xf32, #tpu.memory_space<vmem>>, vector<128x128xf32>
      %c0_12 = arith.constant 0 : index
      %c0_13 = arith.constant 0 : index
      %13 = vector.load %arg4[%c0_12, %c0_13] : memref<1x128xf32, #tpu.memory_space<vmem>>, vector<1x128xf32>
      %14 = vector.broadcast %13 : vector<1x128xf32> to vector<128x128xf32>
      %15 = arith.addf %12, %14 : vector<128x128xf32>
      %cst_14 = arith.constant 0.000000e+00 : f32
      %16 = vector.broadcast %cst_14 : f32 to vector<128x128xf32>
      %17 = arith.maximumf %15, %16 : vector<128x128xf32>
      %18 = arith.truncf %17 : vector<128x128xf32> to vector<128x128xbf16>
      %c0_15 = arith.constant 0 : index
      %c0_16 = arith.constant 0 : index
      %19 = vector.load %arg5[%c0_15, %c0_16] : memref<128x128xbf16, #tpu.memory_space<vmem>>, vector<128x128xbf16>
      %cst_17 = arith.constant dense<0.000000e+00> : vector<128x128xf32>
      %20 = tpu.matmul %18, %19, %cst_17 {dimension_numbers = #tpu.dot_dimension_numbers<[1], [0], [0], [1], [0, 0, 1, 1], [], []>} : vector<128x128xbf16>, vector<128x128xbf16>, vector<128x128xf32> -> vector<128x128xf32>
      %c0_18 = arith.constant 0 : index
      %c0_19 = arith.constant 0 : index
      %21 = vector.load %arg6[%c0_18, %c0_19] : memref<1x128xf32, #tpu.memory_space<vmem>>, vector<1x128xf32>
      %22 = vector.broadcast %21 : vector<1x128xf32> to vector<128x128xf32>
      %23 = arith.addf %20, %22 : vector<128x128xf32>
      %cst_20 = arith.constant dense<0xFF800000> : vector<128xf32>
      %24 = vector.multi_reduction <maximumf>, %23, %cst_20 [1] : vector<128x128xf32> to vector<128xf32>
      %25 = vector.shape_cast %24 : vector<128xf32> to vector<128x1xf32>
      %26 = vector.broadcast %25 : vector<128x1xf32> to vector<128x128xf32>
      %27 = arith.subf %23, %26 : vector<128x128xf32>
      %28 = math.exp %27 : vector<128x128xf32>
      %cst_21 = arith.constant dense<0.000000e+00> : vector<128xf32>
      %29 = vector.multi_reduction <add>, %28, %cst_21 [1] : vector<128x128xf32> to vector<128xf32>
      %30 = vector.shape_cast %29 : vector<128xf32> to vector<128x1xf32>
      %31 = math.log %30 : vector<128x1xf32>
      %32 = vector.broadcast %31 : vector<128x1xf32> to vector<128x128xf32>
      %33 = arith.subf %27, %32 : vector<128x128xf32>
      %c0_22 = arith.constant 0 : index
      %c0_23 = arith.constant 0 : index
      %34 = vector.load %arg7[%c0_22, %c0_23] : memref<128x128xf32, #tpu.memory_space<vmem>>, vector<128x128xf32>
      tpu.vector_store %arg7[%c0_22, %c0_23], %33 {strides = array<i32>} : memref<128x128xf32, #tpu.memory_space<vmem>>, vector<128x128xf32>,
    } else {
    }
    return
  }
  func.func @transform_0(%arg0: i32, %arg1: i32) -> (i32, i32) {
    %c0_i32 = arith.constant 0 : i32
    return %arg0, %arg1 : i32, i32
  }
  func.func @transform_1(%arg0: i32, %arg1: i32) -> (i32, i32) {
    %c0_i32 = arith.constant 0 : i32
    %c0_i32_0 = arith.constant 0 : i32
    return %arg1, %c0_i32 : i32, i32
  }
  func.func @transform_2(%arg0: i32, %arg1: i32) -> (i32, i32) {
    %c0_i32 = arith.constant 0 : i32
    %c0_i32_0 = arith.constant 0 : i32
    %c0_i32_1 = arith.constant 0 : i32
    return %c0_i32, %c0_i32_0 : i32, i32
  }
  func.func @transform_3(%arg0: i32, %arg1: i32) -> (i32, i32) {
    %c0_i32 = arith.constant 0 : i32
    %c0_i32_0 = arith.constant 0 : i32
    %c0_i32_1 = arith.constant 0 : i32
    return %c0_i32, %c0_i32_0 : i32, i32
  }
  func.func @transform_4(%arg0: i32, %arg1: i32) -> (i32, i32) {
    %c0_i32 = arith.constant 0 : i32
    %c0_i32_0 = arith.constant 0 : i32
    %c0_i32_1 = arith.constant 0 : i32
    return %c0_i32, %c0_i32_0 : i32, i32
  }
  func.func @transform_5(%arg0: i32, %arg1: i32) -> (i32, i32) {
    %c0_i32 = arith.constant 0 : i32
    %c0_i32_0 = arith.constant 0 : i32
    return %arg0, %c0_i32 : i32, i32
  }
}

module attributes {stable_mosaic.version = 11 : i64} {
  func.func @_gcn_layer1_kernel(%arg0: i32, %arg1: i32, %arg2: memref<128x128xbf16, #tpu.memory_space<vmem>>, %arg3: memref<128x128xbf16, #tpu.memory_space<vmem>>, %arg4: memref<1x128xf32, #tpu.memory_space<vmem>>, %arg5: memref<128x128xbf16, #tpu.memory_space<vmem>>, %arg6: memref<128x128xbf16, #tpu.memory_space<vmem>>, %arg7: memref<128x128xf32, #tpu.memory_space<vmem>>) attributes {dimension_semantics = [#tpu.dimension_semantics<parallel>, #tpu.dimension_semantics<arbitrary>], iteration_bounds = array<i64: 1, 1>, scalar_prefetch = 0 : i64, scratch_operands = 1 : i64, tpu.core_type = #tpu.core_type<tc>, window_params = [{transform_indices = @transform_0, window_bounds = array<i64: 128, 128>}, {transform_indices = @transform_1, window_bounds = array<i64: 128, 128>}, {pipeline_mode = #tpu.pipeline_mode<synchronous>, transform_indices = @transform_2, window_bounds = array<i64: 1, 128>}, {pipeline_mode = #tpu.pipeline_mode<synchronous>, transform_indices = @transform_3, window_bounds = array<i64: 128, 128>}, {transform_indices = @transform_4, window_bounds = array<i64: 128, 128>}]} {
    %c0_i32 = arith.constant 0 : i32
    %0 = arith.cmpi eq, %arg1, %c0_i32 : i32
    %1 = arith.extui %0 : i1 to i32
    %c0_i32_0 = arith.constant 0 : i32
    %2 = arith.cmpi ne, %1, %c0_i32_0 : i32
    scf.if %2 {
      %cst_10 = arith.constant 0.000000e+00 : f32
      %12 = vector.broadcast %cst_10 : f32 to vector<128x128xf32>
      %c0_11 = arith.constant 0 : index
      %c0_12 = arith.constant 0 : index
      %13 = vector.load %arg7[%c0_11, %c0_12] : memref<128x128xf32, #tpu.memory_space<vmem>>, vector<128x128xf32>
      tpu.vector_store %arg7[%c0_11, %c0_12], %12 {strides = array<i32>} : memref<128x128xf32, #tpu.memory_space<vmem>>, vector<128x128xf32>,
    } else {
    }
    %c0 = arith.constant 0 : index
    %c0_1 = arith.constant 0 : index
    %3 = vector.load %arg7[%c0, %c0_1] : memref<128x128xf32, #tpu.memory_space<vmem>>, vector<128x128xf32>
    %c0_2 = arith.constant 0 : index
    %c0_3 = arith.constant 0 : index
    %4 = vector.load %arg2[%c0_2, %c0_3] : memref<128x128xbf16, #tpu.memory_space<vmem>>, vector<128x128xbf16>
    %c0_4 = arith.constant 0 : index
    %c0_5 = arith.constant 0 : index
    %5 = vector.load %arg3[%c0_4, %c0_5] : memref<128x128xbf16, #tpu.memory_space<vmem>>, vector<128x128xbf16>
    %cst = arith.constant dense<0.000000e+00> : vector<128x128xf32>
    %6 = tpu.matmul %4, %5, %cst {dimension_numbers = #tpu.dot_dimension_numbers<[1], [0], [0], [1], [0, 0, 1, 1], [], []>} : vector<128x128xbf16>, vector<128x128xbf16>, vector<128x128xf32> -> vector<128x128xf32>
    %7 = arith.addf %3, %6 : vector<128x128xf32>
    %c0_6 = arith.constant 0 : index
    %c0_7 = arith.constant 0 : index
    %8 = vector.load %arg7[%c0_6, %c0_7] : memref<128x128xf32, #tpu.memory_space<vmem>>, vector<128x128xf32>
    tpu.vector_store %arg7[%c0_6, %c0_7], %7 {strides = array<i32>} : memref<128x128xf32, #tpu.memory_space<vmem>>, vector<128x128xf32>,
    %c0_i32_8 = arith.constant 0 : i32
    %9 = arith.cmpi eq, %arg1, %c0_i32_8 : i32
    %10 = arith.extui %9 : i1 to i32
    %c0_i32_9 = arith.constant 0 : i32
    %11 = arith.cmpi ne, %10, %c0_i32_9 : i32
    scf.if %11 {
      %c0_10 = arith.constant 0 : index
      %c0_11 = arith.constant 0 : index
      %12 = vector.load %arg7[%c0_10, %c0_11] : memref<128x128xf32, #tpu.memory_space<vmem>>, vector<128x128xf32>
      %c0_12 = arith.constant 0 : index
      %c0_13 = arith.constant 0 : index
      %13 = vector.load %arg4[%c0_12, %c0_13] : memref<1x128xf32, #tpu.memory_space<vmem>>, vector<1x128xf32>
      %14 = vector.broadcast %13 : vector<1x128xf32> to vector<128x128xf32>
      %15 = arith.addf %12, %14 : vector<128x128xf32>
      %cst_14 = arith.constant 0.000000e+00 : f32
      %16 = vector.broadcast %cst_14 : f32 to vector<128x128xf32>
      %17 = arith.maximumf %15, %16 : vector<128x128xf32>
      %18 = arith.truncf %17 : vector<128x128xf32> to vector<128x128xbf16>
      %c0_15 = arith.constant 0 : index
      %c0_16 = arith.constant 0 : index
      %19 = vector.load %arg5[%c0_15, %c0_16] : memref<128x128xbf16, #tpu.memory_space<vmem>>, vector<128x128xbf16>
      %cst_17 = arith.constant dense<0.000000e+00> : vector<128x128xf32>
      %20 = tpu.matmul %18, %19, %cst_17 {dimension_numbers = #tpu.dot_dimension_numbers<[1], [0], [0], [1], [0, 0, 1, 1], [], []>} : vector<128x128xbf16>, vector<128x128xbf16>, vector<128x128xf32> -> vector<128x128xf32>
      %21 = arith.truncf %20 : vector<128x128xf32> to vector<128x128xbf16>
      %c0_18 = arith.constant 0 : index
      %c0_19 = arith.constant 0 : index
      %22 = vector.load %arg6[%c0_18, %c0_19] : memref<128x128xbf16, #tpu.memory_space<vmem>>, vector<128x128xbf16>
      tpu.vector_store %arg6[%c0_18, %c0_19], %21 {strides = array<i32>} : memref<128x128xbf16, #tpu.memory_space<vmem>>, vector<128x128xbf16>,
    } else {
    }
    return
  }
  func.func @transform_0(%arg0: i32, %arg1: i32) -> (i32, i32) {
    %c0_i32 = arith.constant 0 : i32
    return %arg0, %arg1 : i32, i32
  }
  func.func @transform_1(%arg0: i32, %arg1: i32) -> (i32, i32) {
    %c0_i32 = arith.constant 0 : i32
    %c0_i32_0 = arith.constant 0 : i32
    return %arg1, %c0_i32 : i32, i32
  }
  func.func @transform_2(%arg0: i32, %arg1: i32) -> (i32, i32) {
    %c0_i32 = arith.constant 0 : i32
    %c0_i32_0 = arith.constant 0 : i32
    %c0_i32_1 = arith.constant 0 : i32
    return %c0_i32, %c0_i32_0 : i32, i32
  }
  func.func @transform_3(%arg0: i32, %arg1: i32) -> (i32, i32) {
    %c0_i32 = arith.constant 0 : i32
    %c0_i32_0 = arith.constant 0 : i32
    %c0_i32_1 = arith.constant 0 : i32
    return %c0_i32, %c0_i32_0 : i32, i32
  }
  func.func @transform_4(%arg0: i32, %arg1: i32) -> (i32, i32) {
    %c0_i32 = arith.constant 0 : i32
    %c0_i32_0 = arith.constant 0 : i32
    return %arg0, %c0_i32 : i32, i32
  }
}

</mosaic_0001>

<llo_original>
// kernel: base_gnn_forward.2
$region0: #{base_gnn_forward.2}
  #allocation0 [shape = 'u32[]', space=smem, size = 0x4, offset = 0x4, fixed_abs, tag = 'smem constant byte address 0x4 - core index']
  #allocation1 [shape = 'u32[144,128]{1,0:T(1,128)}', space=vmem, size = 0x12000, scoped, tag = 'internal scratch']
  #allocation2 [shape = 'f32[128,128]{1,0:T(8,128)}', space=vmem, size = 0x10000, scoped, tag = 'scratch operand']
  %s0 = inlined_call_operand.vmem [shape: bf16[128,128], index: 0, kind: input, shape index: {}]
  %s1 = inlined_call_operand.vmem [shape: bf16[128,128], index: 1, kind: input, shape index: {}]
  %s2 = inlined_call_operand.vmem [shape: f32[1,128], index: 2, kind: input, shape index: {}]
  %s3 = inlined_call_operand.vmem [shape: bf16[128,128], index: 3, kind: input, shape index: {}]
  %s4 = inlined_call_operand.vmem [shape: bf16[128,128], index: 4, kind: output, shape index: {}]
  %s5 = sld [smem:[#allocation0]]
  $region34: #{base_gnn_forward.2} parent=0
    _
  %s7 = ssub.s32 1, %s5
  %s8 = scalar_select 0, %s7, %s5
  // Predicated region
  $region2: #{base_gnn_forward.2} parent=0 // pred_check
    _
  $region3: #{base_gnn_forward.2} parent=0 // pred_check_branch
    %10 = sbr.rel (0) target = $region5
  $region4: #{base_gnn_forward.2} parent=0 // pred_region
    _
  $region5: #{base_gnn_forward.2} parent=0 // pred_fallthru
    _
  // Predicated region
  $region6: #{base_gnn_forward.2} parent=0 // pred_check
    _
  $region7: #{base_gnn_forward.2} parent=0 // pred_check_branch
    %12 = sbr.rel (0) target = $region9
  $region8: #{base_gnn_forward.2} parent=0 // pred_region
    _
  $region9: #{base_gnn_forward.2} parent=0 // pred_fallthru
    _
  // Predicated region
  $region10: #{base_gnn_forward.2} parent=0 // pred_check
    _
  $region11: #{base_gnn_forward.2} parent=0 // pred_check_branch
    %14 = sbr.rel (0) target = $region13
  $region12: #{base_gnn_forward.2} parent=0 // pred_region
    _
  $region13: #{base_gnn_forward.2} parent=0 // pred_fallthru
    _
  // Predicated region
  $region14: #{base_gnn_forward.2} parent=0 // pred_check
    _
  $region15: #{base_gnn_forward.2} parent=0 // pred_check_branch
    %16 = sbr.rel (0) target = $region17
  $region16: #{base_gnn_forward.2} parent=0 // pred_region
    _
  $region17: #{base_gnn_forward.2} parent=0 // pred_fallthru
    _
  %p18 = scmp.eq.s32.totalorder 0, 0
  // Predicated region
  $region18: #{base_gnn_forward.2} parent=0 // pred_check
    %p19 = pneg %p18
  $region19: #{base_gnn_forward.2} parent=0 // pred_check_branch
    %21 = sbr.rel (%p19) target = $region21
  $region20: #{base_gnn_forward.2} parent=0 // pred_region
    %22 = vst [vmem:[#allocation2] sm:$0xff] 0.0
    %23 = vst [vmem:[#allocation2 + $0x8] sm:$0xff] 0.0
    %24 = vst [vmem:[#allocation2 + $0x10] sm:$0xff] 0.0
    %25 = vst [vmem:[#allocation2 + $0x18] sm:$0xff] 0.0
    %26 = vst [vmem:[#allocation2 + $0x20] sm:$0xff] 0.0
    %27 = vst [vmem:[#allocation2 + $0x28] sm:$0xff] 0.0
    %28 = vst [vmem:[#allocation2 + $0x30] sm:$0xff] 0.0
    %29 = vst [vmem:[#allocation2 + $0x38] sm:$0xff] 0.0
    %30 = vst [vmem:[#allocation2 + $0x40] sm:$0xff] 0.0
    %31 = vst [vmem:[#allocation2 + $0x48] sm:$0xff] 0.0
    %32 = vst [vmem:[#allocation2 + $0x50] sm:$0xff] 0.0
    %33 = vst [vmem:[#allocation2 + $0x58] sm:$0xff] 0.0
    %34 = vst [vmem:[#allocation2 + $0x60] sm:$0xff] 0.0
    %35 = vst [vmem:[#allocation2 + $0x68] sm:$0xff] 0.0
    %36 = vst [vmem:[#allocation2 + $0x70] sm:$0xff] 0.0
    %37 = vst [vmem:[#allocation2 + $0x78] sm:$0xff] 0.0
  $region21: #{base_gnn_forward.2} parent=0 // pred_fallthru
    _
  %v38 = vld [vmem:[#allocation2] sm:$0xff]
  %v39 = vld [vmem:[#allocation2 + $0x8] sm:$0xff]
  %v40 = vld [vmem:[#allocation2 + $0x10] sm:$0xff]
  %v41 = vld [vmem:[#allocation2 + $0x18] sm:$0xff]
  %v42 = vld [vmem:[#allocation2 + $0x20] sm:$0xff]
  %v43 = vld [vmem:[#allocation2 + $0x28] sm:$0xff]
  %v44 = vld [vmem:[#allocation2 + $0x30] sm:$0xff]
  %v45 = vld [vmem:[#allocation2 + $0x38] sm:$0xff]
  %v46 = vld [vmem:[#allocation2 + $0x40] sm:$0xff]
  %v47 = vld [vmem:[#allocation2 + $0x48] sm:$0xff]
  %v48 = vld [vmem:[#allocation2 + $0x50] sm:$0xff]
  %v49 = vld [vmem:[#allocation2 + $0x58] sm:$0xff]
  %v50 = vld [vmem:[#allocation2 + $0x60] sm:$0xff]
  %v51 = vld [vmem:[#allocation2 + $0x68] sm:$0xff]
  %v52 = vld [vmem:[#allocation2 + $0x70] sm:$0xff]
  %v53 = vld [vmem:[#allocation2 + $0x78] sm:$0xff]
  %v54 = vld [vmem:[%s0] sm:$0xf]
  %v55 = vld [vmem:[%s0 + $0x4] sm:$0xf]
  %v56 = vld [vmem:[%s0 + $0x8] sm:$0xf]
  %v57 = vld [vmem:[%s0 + $0xc] sm:$0xf]
  %v58 = vld [vmem:[%s0 + $0x10] sm:$0xf]
  %v59 = vld [vmem:[%s0 + $0x14] sm:$0xf]
  %v60 = vld [vmem:[%s0 + $0x18] sm:$0xf]
  %v61 = vld [vmem:[%s0 + $0x1c] sm:$0xf]
  %v62 = vld [vmem:[%s0 + $0x20] sm:$0xf]
  %v63 = vld [vmem:[%s0 + $0x24] sm:$0xf]
  %v64 = vld [vmem:[%s0 + $0x28] sm:$0xf]
  %v65 = vld [vmem:[%s0 + $0x2c] sm:$0xf]
  %v66 = vld [vmem:[%s0 + $0x30] sm:$0xf]
  %v67 = vld [vmem:[%s0 + $0x34] sm:$0xf]
  %v68 = vld [vmem:[%s0 + $0x38] sm:$0xf]
  %v69 = vld [vmem:[%s0 + $0x3c] sm:$0xf]
  %v70 = vld [vmem:[%s1] sm:$0xf]
  %v71 = vld [vmem:[%s1 + $0x4] sm:$0xf]
  %v72 = vld [vmem:[%s1 + $0x8] sm:$0xf]
  %v73 = vld [vmem:[%s1 + $0xc] sm:$0xf]
  %v74 = vld [vmem:[%s1 + $0x10] sm:$0xf]
  %v75 = vld [vmem:[%s1 + $0x14] sm:$0xf]
  %v76 = vld [vmem:[%s1 + $0x18] sm:$0xf]
  %v77 = vld [vmem:[%s1 + $0x1c] sm:$0xf]
  %v78 = vld [vmem:[%s1 + $0x20] sm:$0xf]
  %v79 = vld [vmem:[%s1 + $0x24] sm:$0xf]
  %v80 = vld [vmem:[%s1 + $0x28] sm:$0xf]
  %v81 = vld [vmem:[%s1 + $0x2c] sm:$0xf]
  %v82 = vld [vmem:[%s1 + $0x30] sm:$0xf]
  %v83 = vld [vmem:[%s1 + $0x34] sm:$0xf]
  %v84 = vld [vmem:[%s1 + $0x38] sm:$0xf]
  %v85 = vld [vmem:[%s1 + $0x3c] sm:$0xf]
  %v102 = vunpack.c.l.b16 %v54
  %v103 = vunpack.c.l.b16 %v55
  %v104 = vunpack.c.l.b16 %v56
  %v105 = vunpack.c.l.b16 %v57
  %v106 = vunpack.c.l.b16 %v58
  %v107 = vunpack.c.l.b16 %v59
  %v108 = vunpack.c.l.b16 %v60
  %v109 = vunpack.c.l.b16 %v61
  %v110 = vunpack.c.l.b16 %v62
  %v111 = vunpack.c.l.b16 %v63
  %v112 = vunpack.c.l.b16 %v64
  %v113 = vunpack.c.l.b16 %v65
  %v114 = vunpack.c.l.b16 %v66
  %v115 = vunpack.c.l.b16 %v67
  %v116 = vunpack.c.l.b16 %v68
  %v117 = vunpack.c.l.b16 %v69
  %v118 = vpack.c.b16 %v103, %v102
  %v119 = vpack.c.b16 %v105, %v104
  %v120 = vpack.c.b16 %v107, %v106
  %v121 = vpack.c.b16 %v109, %v108
  %v122 = vpack.c.b16 %v111, %v110
  %v123 = vpack.c.b16 %v113, %v112
  %v124 = vpack.c.b16 %v115, %v114
  %v125 = vpack.c.b16 %v117, %v116
  %v150 = vunpack.c.l.b16 %v70
  %v151 = vunpack.c.l.b16 %v71
  %v152 = vunpack.c.l.b16 %v72
  %v153 = vunpack.c.l.b16 %v73
  %v154 = vunpack.c.l.b16 %v74
  %v155 = vunpack.c.l.b16 %v75
  %v156 = vunpack.c.l.b16 %v76
  %v157 = vunpack.c.l.b16 %v77
  %v158 = vunpack.c.l.b16 %v78
  %v159 = vunpack.c.l.b16 %v79
  %v160 = vunpack.c.l.b16 %v80
  %v161 = vunpack.c.l.b16 %v81
  %v162 = vunpack.c.l.b16 %v82
  %v163 = vunpack.c.l.b16 %v83
  %v164 = vunpack.c.l.b16 %v84
  %v165 = vunpack.c.l.b16 %v85
  %v166 = vpack.c.b16 %v151, %v150
  %v167 = vpack.c.b16 %v153, %v152
  %v168 = vpack.c.b16 %v155, %v154
  %v169 = vpack.c.b16 %v157, %v156
  %v170 = vpack.c.b16 %v159, %v158
  %v171 = vpack.c.b16 %v161, %v160
  %v172 = vpack.c.b16 %v163, %v162
  %v173 = vpack.c.b16 %v165, %v164
  %182 = vmatprep.subr.bf16.mxu0 0
  %183 = vmatpush1.bf16.msra.mxu0 %v166
  %184 = vmatprep.subr.bf16.mxu0 0
  %185 = vmatpush1.bf16.msra.mxu0 %v167
  %186 = vmatprep.subr.bf16.mxu0 0
  %187 = vmatpush1.bf16.msra.mxu0 %v168
  %188 = vmatprep.subr.bf16.mxu0 0
  %189 = vmatpush1.bf16.msra.mxu0 %v169
  %190 = vmatprep.subr.bf16.mxu0 0
  %191 = vmatpush1.bf16.msra.mxu0 %v170
  %192 = vmatprep.subr.bf16.mxu0 0
  %193 = vmatpush1.bf16.msra.mxu0 %v171
  %194 = vmatprep.subr.bf16.mxu0 0
  %195 = vmatpush1.bf16.msra.mxu0 %v172
  %196 = vmatprep.subr.bf16.mxu0 0
  %197 = vmatpush1.bf16.msra.mxu0 %v173
  %198 = vmatprep.subr.bf16.mxu0 0
  %199 = vmatpush1.bf16.msra.mxu0 0
  %200 = vmatprep.subr.bf16.mxu0 0
  %201 = vmatpush1.bf16.msra.mxu0 0
  %202 = vmatprep.subr.bf16.mxu0 0
  %203 = vmatpush1.bf16.msra.mxu0 0
  %204 = vmatprep.subr.bf16.mxu0 0
  %205 = vmatpush1.bf16.msra.mxu0 0
  %206 = vmatprep.subr.bf16.mxu0 0
  %207 = vmatpush1.bf16.msra.mxu0 0
  %208 = vmatprep.subr.bf16.mxu0 0
  %209 = vmatpush1.bf16.msra.mxu0 0
  %210 = vmatprep.subr.bf16.mxu0 0
  %211 = vmatpush1.bf16.msra.mxu0 0
  %212 = vmatprep.subr.bf16.mxu0 0
  %213 = vmatpush1.bf16.msra.mxu0 0
  %214 = vmatprep.mubr.bf16.mxu0 0
  %215 = vmatmul.mubr.bf16.gmra.mrb[0].mxu0 %v118
  %v216 = vpop.f32.mrb[0].mxu0
  %v217 = vadd.f32 0.0, %v216
  %v218 = vpop.f32.mrb[0].mxu0
  %v219 = vpop.f32.mrb[0].mxu0
  %v220 = vadd.f32 0.0, %v219
  %v221 = vpop.f32.mrb[0].mxu0
  %222 = vmatprep.mubr.bf16.mxu0 0
  %223 = vmatmul.mubr.bf16.gmra.mrb[0].mxu0 %v119
  %v224 = vpop.f32.mrb[0].mxu0
  %v225 = vadd.f32 0.0, %v224
  %v226 = vpop.f32.mrb[0].mxu0
  %v227 = vpop.f32.mrb[0].mxu0
  %v228 = vadd.f32 0.0, %v227
  %v229 = vpop.f32.mrb[0].mxu0
  %230 = vmatprep.mubr.bf16.mxu0 0
  %231 = vmatmul.mubr.bf16.gmra.mrb[0].mxu0 %v120
  %v232 = vpop.f32.mrb[0].mxu0
  %v233 = vadd.f32 0.0, %v232
  %v234 = vpop.f32.mrb[0].mxu0
  %v235 = vpop.f32.mrb[0].mxu0
  %v236 = vadd.f32 0.0, %v235
  %v237 = vpop.f32.mrb[0].mxu0
  %238 = vmatprep.mubr.bf16.mxu0 0
  %239 = vmatmul.mubr.bf16.gmra.mrb[0].mxu0 %v121
  %v240 = vpop.f32.mrb[0].mxu0
  %v241 = vadd.f32 0.0, %v240
  %v242 = vpop.f32.mrb[0].mxu0
  %v243 = vpop.f32.mrb[0].mxu0
  %v244 = vadd.f32 0.0, %v243
  %v245 = vpop.f32.mrb[0].mxu0
  %246 = vmatprep.mubr.bf16.mxu0 0
  %247 = vmatmul.mubr.bf16.gmra.mrb[0].mxu0 %v122
  %v248 = vpop.f32.mrb[0].mxu0
  %v249 = vadd.f32 0.0, %v248
  %v250 = vpop.f32.mrb[0].mxu0
  %v251 = vpop.f32.mrb[0].mxu0
  %v252 = vadd.f32 0.0, %v251
  %v253 = vpop.f32.mrb[0].mxu0
  %254 = vmatprep.mubr.bf16.mxu0 0
  %255 = vmatmul.mubr.bf16.gmra.mrb[0].mxu0 %v123
  %v256 = vpop.f32.mrb[0].mxu0
  %v257 = vadd.f32 0.0, %v256
  %v258 = vpop.f32.mrb[0].mxu0
  %v259 = vpop.f32.mrb[0].mxu0
  %v260 = vadd.f32 0.0, %v259
  %v261 = vpop.f32.mrb[0].mxu0
  %262 = vmatprep.mubr.bf16.mxu0 0
  %263 = vmatmul.mubr.bf16.gmra.mrb[0].mxu0 %v124
  %v264 = vpop.f32.mrb[0].mxu0
  %v265 = vadd.f32 0.0, %v264
  %v266 = vpop.f32.mrb[0].mxu0
  %v267 = vpop.f32.mrb[0].mxu0
  %v268 = vadd.f32 0.0, %v267
  %v269 = vpop.f32.mrb[0].mxu0
  %270 = vmatprep.mubr.bf16.mxu0 0
  %271 = vmatmul.mubr.bf16.gmra.mrb[0].mxu0 %v125
  %v272 = vpop.f32.mrb[0].mxu0
  %v273 = vadd.f32 0.0, %v272
  %v274 = vpop.f32.mrb[0].mxu0
  %v275 = vpop.f32.mrb[0].mxu0
  %v276 = vadd.f32 0.0, %v275
  %v277 = vpop.f32.mrb[0].mxu0
  %278 = vdwg.mxu0
  %v279 = vadd.f32 %v38, %v217
  %v280 = vadd.f32 %v39, %v220
  %v281 = vadd.f32 %v40, %v225
  %v282 = vadd.f32 %v41, %v228
  %v283 = vadd.f32 %v42, %v233
  %v284 = vadd.f32 %v43, %v236
  %v285 = vadd.f32 %v44, %v241
  %v286 = vadd.f32 %v45, %v244
  %v287 = vadd.f32 %v46, %v249
  %v288 = vadd.f32 %v47, %v252
  %v289 = vadd.f32 %v48, %v257
  %v290 = vadd.f32 %v49, %v260
  %v291 = vadd.f32 %v50, %v265
  %v292 = vadd.f32 %v51, %v268
  %v293 = vadd.f32 %v52, %v273
  %v294 = vadd.f32 %v53, %v276
  %295 = vst [vmem:[#allocation2] sm:$0xff] %v279
  %296 = vst [vmem:[#allocation2 + $0x8] sm:$0xff] %v280
  %297 = vst [vmem:[#allocation2 + $0x10] sm:$0xff] %v281
  %298 = vst [vmem:[#allocation2 + $0x18] sm:$0xff] %v282
  %299 = vst [vmem:[#allocation2 + $0x20] sm:$0xff] %v283
  %300 = vst [vmem:[#allocation2 + $0x28] sm:$0xff] %v284
  %301 = vst [vmem:[#allocation2 + $0x30] sm:$0xff] %v285
  %302 = vst [vmem:[#allocation2 + $0x38] sm:$0xff] %v286
  %303 = vst [vmem:[#allocation2 + $0x40] sm:$0xff] %v287
  %304 = vst [vmem:[#allocation2 + $0x48] sm:$0xff] %v288
  %305 = vst [vmem:[#allocation2 + $0x50] sm:$0xff] %v289
  %306 = vst [vmem:[#allocation2 + $0x58] sm:$0xff] %v290
  %307 = vst [vmem:[#allocation2 + $0x60] sm:$0xff] %v291
  %308 = vst [vmem:[#allocation2 + $0x68] sm:$0xff] %v292
  %309 = vst [vmem:[#allocation2 + $0x70] sm:$0xff] %v293
  %310 = vst [vmem:[#allocation2 + $0x78] sm:$0xff] %v294
  // Predicated region
  $region22: #{base_gnn_forward.2} parent=0 // pred_check
    %p311 = pneg %p18
  $region23: #{base_gnn_forward.2} parent=0 // pred_check_branch
    %313 = sbr.rel (%p311) target = $region25
  $region24: #{base_gnn_forward.2} parent=0 // pred_region
    %v314 = vld [vmem:[#allocation2] sm:$0xff]
    %v315 = vld [vmem:[#allocation2 + $0x8] sm:$0xff]
    %v316 = vld [vmem:[#allocation2 + $0x10] sm:$0xff]
    %v317 = vld [vmem:[#allocation2 + $0x18] sm:$0xff]
    %v318 = vld [vmem:[#allocation2 + $0x20] sm:$0xff]
    %v319 = vld [vmem:[#allocation2 + $0x28] sm:$0xff]
    %v320 = vld [vmem:[#allocation2 + $0x30] sm:$0xff]
    %v321 = vld [vmem:[#allocation2 + $0x38] sm:$0xff]
    %v322 = vld [vmem:[#allocation2 + $0x40] sm:$0xff]
    %v323 = vld [vmem:[#allocation2 + $0x48] sm:$0xff]
    %v324 = vld [vmem:[#allocation2 + $0x50] sm:$0xff]
    %v325 = vld [vmem:[#allocation2 + $0x58] sm:$0xff]
    %v326 = vld [vmem:[#allocation2 + $0x60] sm:$0xff]
    %v327 = vld [vmem:[#allocation2 + $0x68] sm:$0xff]
    %v328 = vld [vmem:[#allocation2 + $0x70] sm:$0xff]
    %v329 = vld [vmem:[#allocation2 + $0x78] sm:$0xff]
    %v330 = vld [vmem:[%s2] sm:$0x1]
    %v332 = vlaneseq
    %v333 = vshrl.u32 %v332, 7
    %v334 = vsub.s32 0, %v333
    %v335 = vrot.slane %v330, %v334
    %v337 = vadd.f32 %v314, %v335
    %v338 = vadd.f32 %v315, %v335
    %v339 = vadd.f32 %v316, %v335
    %v340 = vadd.f32 %v317, %v335
    %v341 = vadd.f32 %v318, %v335
    %v342 = vadd.f32 %v319, %v335
    %v343 = vadd.f32 %v320, %v335
    %v344 = vadd.f32 %v321, %v335
    %v345 = vadd.f32 %v322, %v335
    %v346 = vadd.f32 %v323, %v335
    %v347 = vadd.f32 %v324, %v335
    %v348 = vadd.f32 %v325, %v335
    %v349 = vadd.f32 %v326, %v335
    %v350 = vadd.f32 %v327, %v335
    %v351 = vadd.f32 %v328, %v335
    %v352 = vadd.f32 %v329, %v335
    %v353 = vmax.f32 %v337, 0.0
    %v354 = vmax.f32 %v338, 0.0
    %v355 = vmax.f32 %v339, 0.0
    %v356 = vmax.f32 %v340, 0.0
    %v357 = vmax.f32 %v341, 0.0
    %v358 = vmax.f32 %v342, 0.0
    %v359 = vmax.f32 %v343, 0.0
    %v360 = vmax.f32 %v344, 0.0
    %v361 = vmax.f32 %v345, 0.0
    %v362 = vmax.f32 %v346, 0.0
    %v363 = vmax.f32 %v347, 0.0
    %v364 = vmax.f32 %v348, 0.0
    %v365 = vmax.f32 %v349, 0.0
    %v366 = vmax.f32 %v350, 0.0
    %v367 = vmax.f32 %v351, 0.0
    %v368 = vmax.f32 %v352, 0.0
    %v369 = vpack.c.bf16 %v354, %v353
    %v370 = vpack.c.bf16 %v356, %v355
    %v371 = vpack.c.bf16 %v358, %v357
    %v372 = vpack.c.bf16 %v360, %v359
    %v373 = vpack.c.bf16 %v362, %v361
    %v374 = vpack.c.bf16 %v364, %v363
    %v375 = vpack.c.bf16 %v366, %v365
    %v376 = vpack.c.bf16 %v368, %v367
    %v377 = vld [vmem:[%s3] sm:$0xf]
    %v378 = vld [vmem:[%s3 + $0x4] sm:$0xf]
    %v379 = vld [vmem:[%s3 + $0x8] sm:$0xf]
    %v380 = vld [vmem:[%s3 + $0xc] sm:$0xf]
    %v381 = vld [vmem:[%s3 + $0x10] sm:$0xf]
    %v382 = vld [vmem:[%s3 + $0x14] sm:$0xf]
    %v383 = vld [vmem:[%s3 + $0x18] sm:$0xf]
    %v384 = vld [vmem:[%s3 + $0x1c] sm:$0xf]
    %v385 = vld [vmem:[%s3 + $0x20] sm:$0xf]
    %v386 = vld [vmem:[%s3 + $0x24] sm:$0xf]
    %v387 = vld [vmem:[%s3 + $0x28] sm:$0xf]
    %v388 = vld [vmem:[%s3 + $0x2c] sm:$0xf]
    %v389 = vld [vmem:[%s3 + $0x30] sm:$0xf]
    %v390 = vld [vmem:[%s3 + $0x34] sm:$0xf]
    %v391 = vld [vmem:[%s3 + $0x38] sm:$0xf]
    %v392 = vld [vmem:[%s3 + $0x3c] sm:$0xf]
    %v409 = vunpack.c.l.b16 %v377
    %v410 = vunpack.c.l.b16 %v378
    %v411 = vunpack.c.l.b16 %v379
    %v412 = vunpack.c.l.b16 %v380
    %v413 = vunpack.c.l.b16 %v381
    %v414 = vunpack.c.l.b16 %v382
    %v415 = vunpack.c.l.b16 %v383
    %v416 = vunpack.c.l.b16 %v384
    %v417 = vunpack.c.l.b16 %v385
    %v418 = vunpack.c.l.b16 %v386
    %v419 = vunpack.c.l.b16 %v387
    %v420 = vunpack.c.l.b16 %v388
    %v421 = vunpack.c.l.b16 %v389
    %v422 = vunpack.c.l.b16 %v390
    %v423 = vunpack.c.l.b16 %v391
    %v424 = vunpack.c.l.b16 %v392
    %v425 = vpack.c.b16 %v410, %v409
    %v426 = vpack.c.b16 %v412, %v411
    %v427 = vpack.c.b16 %v414, %v413
    %v428 = vpack.c.b16 %v416, %v415
    %v429 = vpack.c.b16 %v418, %v417
    %v430 = vpack.c.b16 %v420, %v419
    %v431 = vpack.c.b16 %v422, %v421
    %v432 = vpack.c.b16 %v424, %v423
    %441 = vmatprep.subr.bf16.mxu0 0
    %442 = vmatpush1.bf16.msra.mxu0 %v425
    %443 = vmatprep.subr.bf16.mxu0 0
    %444 = vmatpush1.bf16.msra.mxu0 %v426
    %445 = vmatprep.subr.bf16.mxu0 0
    %446 = vmatpush1.bf16.msra.mxu0 %v427
    %447 = vmatprep.subr.bf16.mxu0 0
    %448 = vmatpush1.bf16.msra.mxu0 %v428
    %449 = vmatprep.subr.bf16.mxu0 0
    %450 = vmatpush1.bf16.msra.mxu0 %v429
    %451 = vmatprep.subr.bf16.mxu0 0
    %452 = vmatpush1.bf16.msra.mxu0 %v430
    %453 = vmatprep.subr.bf16.mxu0 0
    %454 = vmatpush1.bf16.msra.mxu0 %v431
    %455 = vmatprep.subr.bf16.mxu0 0
    %456 = vmatpush1.bf16.msra.mxu0 %v432
    %457 = vmatprep.subr.bf16.mxu0 0
    %458 = vmatpush1.bf16.msra.mxu0 0
    %459 = vmatprep.subr.bf16.mxu0 0
    %460 = vmatpush1.bf16.msra.mxu0 0
    %461 = vmatprep.subr.bf16.mxu0 0
    %462 = vmatpush1.bf16.msra.mxu0 0
    %463 = vmatprep.subr.bf16.mxu0 0
    %464 = vmatpush1.bf16.msra.mxu0 0
    %465 = vmatprep.subr.bf16.mxu0 0
    %466 = vmatpush1.bf16.msra.mxu0 0
    %467 = vmatprep.subr.bf16.mxu0 0
    %468 = vmatpush1.bf16.msra.mxu0 0
    %469 = vmatprep.subr.bf16.mxu0 0
    %470 = vmatpush1.bf16.msra.mxu0 0
    %471 = vmatprep.subr.bf16.mxu0 0
    %472 = vmatpush1.bf16.msra.mxu0 0
    %473 = vmatprep.mubr.bf16.mxu0 0
    %474 = vmatmul.mubr.bf16.gmra.mrb[0].mxu0 %v369
    %v475 = vpop.f32.mrb[0].mxu0
    %v476 = vadd.f32 0.0, %v475
    %v477 = vpop.f32.mrb[0].mxu0
    %v478 = vpop.f32.mrb[0].mxu0
    %v479 = vadd.f32 0.0, %v478
    %v480 = vpop.f32.mrb[0].mxu0
    %481 = vmatprep.mubr.bf16.mxu0 0
    %482 = vmatmul.mubr.bf16.gmra.mrb[0].mxu0 %v370
    %v483 = vpop.f32.mrb[0].mxu0
    %v484 = vadd.f32 0.0, %v483
    %v485 = vpop.f32.mrb[0].mxu0
    %v486 = vpop.f32.mrb[0].mxu0
    %v487 = vadd.f32 0.0, %v486
    %v488 = vpop.f32.mrb[0].mxu0
    %489 = vmatprep.mubr.bf16.mxu0 0
    %490 = vmatmul.mubr.bf16.gmra.mrb[0].mxu0 %v371
    %v491 = vpop.f32.mrb[0].mxu0
    %v492 = vadd.f32 0.0, %v491
    %v493 = vpop.f32.mrb[0].mxu0
    %v494 = vpop.f32.mrb[0].mxu0
    %v495 = vadd.f32 0.0, %v494
    %v496 = vpop.f32.mrb[0].mxu0
    %497 = vmatprep.mubr.bf16.mxu0 0
    %498 = vmatmul.mubr.bf16.gmra.mrb[0].mxu0 %v372
    %v499 = vpop.f32.mrb[0].mxu0
    %v500 = vadd.f32 0.0, %v499
    %v501 = vpop.f32.mrb[0].mxu0
    %v502 = vpop.f32.mrb[0].mxu0
    %v503 = vadd.f32 0.0, %v502
    %v504 = vpop.f32.mrb[0].mxu0
    %505 = vmatprep.mubr.bf16.mxu0 0
    %506 = vmatmul.mubr.bf16.gmra.mrb[0].mxu0 %v373
    %v507 = vpop.f32.mrb[0].mxu0
    %v508 = vadd.f32 0.0, %v507
    %v509 = vpop.f32.mrb[0].mxu0
    %v510 = vpop.f32.mrb[0].mxu0
    %v511 = vadd.f32 0.0, %v510
    %v512 = vpop.f32.mrb[0].mxu0
    %513 = vmatprep.mubr.bf16.mxu0 0
    %514 = vmatmul.mubr.bf16.gmra.mrb[0].mxu0 %v374
    %v515 = vpop.f32.mrb[0].mxu0
    %v516 = vadd.f32 0.0, %v515
    %v517 = vpop.f32.mrb[0].mxu0
    %v518 = vpop.f32.mrb[0].mxu0
    %v519 = vadd.f32 0.0, %v518
    %v520 = vpop.f32.mrb[0].mxu0
    %521 = vmatprep.mubr.bf16.mxu0 0
    %522 = vmatmul.mubr.bf16.gmra.mrb[0].mxu0 %v375
    %v523 = vpop.f32.mrb[0].mxu0
    %v524 = vadd.f32 0.0, %v523
    %v525 = vpop.f32.mrb[0].mxu0
    %v526 = vpop.f32.mrb[0].mxu0
    %v527 = vadd.f32 0.0, %v526
    %v528 = vpop.f32.mrb[0].mxu0
    %529 = vmatprep.mubr.bf16.mxu0 0
    %530 = vmatmul.mubr.bf16.gmra.mrb[0].mxu0 %v376
    %v531 = vpop.f32.mrb[0].mxu0
    %v532 = vadd.f32 0.0, %v531
    %v533 = vpop.f32.mrb[0].mxu0
    %v534 = vpop.f32.mrb[0].mxu0
    %v535 = vadd.f32 0.0, %v534
    %v536 = vpop.f32.mrb[0].mxu0
    %537 = vdwg.mxu0
    %v538 = vpack.c.bf16 %v479, %v476
    %v539 = vpack.c.bf16 %v487, %v484
    %v540 = vpack.c.bf16 %v495, %v492
    %v541 = vpack.c.bf16 %v503, %v500
    %v542 = vpack.c.bf16 %v511, %v508
    %v543 = vpack.c.bf16 %v519, %v516
    %v544 = vpack.c.bf16 %v527, %v524
    %v545 = vpack.c.bf16 %v535, %v532
    %v554 = vunpack.c.l.b16 %v538
    %v555 = vunpack.c.h.b16 %v538
    %v556 = vunpack.c.l.b16 %v539
    %v557 = vunpack.c.h.b16 %v539
    %v558 = vunpack.c.l.b16 %v540
    %v559 = vunpack.c.h.b16 %v540
    %v560 = vunpack.c.l.b16 %v541
    %v561 = vunpack.c.h.b16 %v541
    %v562 = vunpack.c.l.b16 %v542
    %v563 = vunpack.c.h.b16 %v542
    %v564 = vunpack.c.l.b16 %v543
    %v565 = vunpack.c.h.b16 %v543
    %v566 = vunpack.c.l.b16 %v544
    %v567 = vunpack.c.h.b16 %v544
    %v568 = vunpack.c.l.b16 %v545
    %v569 = vunpack.c.h.b16 %v545
    %v570 = vpack.c.b16 %v554, %v554
    %v571 = vpack.c.b16 %v555, %v555
    %v572 = vpack.c.b16 %v556, %v556
    %v573 = vpack.c.b16 %v557, %v557
    %v574 = vpack.c.b16 %v558, %v558
    %v575 = vpack.c.b16 %v559, %v559
    %v576 = vpack.c.b16 %v560, %v560
    %v577 = vpack.c.b16 %v561, %v561
    %v578 = vpack.c.b16 %v562, %v562
    %v579 = vpack.c.b16 %v563, %v563
    %v580 = vpack.c.b16 %v564, %v564
    %v581 = vpack.c.b16 %v565, %v565
    %v582 = vpack.c.b16 %v566, %v566
    %v583 = vpack.c.b16 %v567, %v567
    %v584 = vpack.c.b16 %v568, %v568
    %v585 = vpack.c.b16 %v569, %v569
    %602 = vst [vmem:[%s4] sm:$0xf] %v570
    %603 = vst [vmem:[%s4 + $0x4] sm:$0xf] %v571
    %604 = vst [vmem:[%s4 + $0x8] sm:$0xf] %v572
    %605 = vst [vmem:[%s4 + $0xc] sm:$0xf] %v573
    %606 = vst [vmem:[%s4 + $0x10] sm:$0xf] %v574
    %607 = vst [vmem:[%s4 + $0x14] sm:$0xf] %v575
    %608 = vst [vmem:[%s4 + $0x18] sm:$0xf] %v576
    %609 = vst [vmem:[%s4 + $0x1c] sm:$0xf] %v577
    %610 = vst [vmem:[%s4 + $0x20] sm:$0xf] %v578
    %611 = vst [vmem:[%s4 + $0x24] sm:$0xf] %v579
    %612 = vst [vmem:[%s4 + $0x28] sm:$0xf] %v580
    %613 = vst [vmem:[%s4 + $0x2c] sm:$0xf] %v581
    %614 = vst [vmem:[%s4 + $0x30] sm:$0xf] %v582
    %615 = vst [vmem:[%s4 + $0x34] sm:$0xf] %v583
    %616 = vst [vmem:[%s4 + $0x38] sm:$0xf] %v584
    %617 = vst [vmem:[%s4 + $0x3c] sm:$0xf] %v585
  $region25: #{base_gnn_forward.2} parent=0 // pred_fallthru
    _
  // Predicated region
  $region26: #{base_gnn_forward.2} parent=0 // pred_check
    _
  $region27: #{base_gnn_forward.2} parent=0 // pred_check_branch
    %619 = sbr.rel (0) target = $region29
  $region28: #{base_gnn_forward.2} parent=0 // pred_region
    _
  $region29: #{base_gnn_forward.2} parent=0 // pred_fallthru
    _
  // Predicated region
  $region30: #{base_gnn_forward.2} parent=0 // pred_check
    _
  $region31: #{base_gnn_forward.2} parent=0 // pred_check_branch
    %621 = sbr.rel (0) target = $region33
  $region32: #{base_gnn_forward.2} parent=0 // pred_region
    _
  $region33: #{base_gnn_forward.2} parent=0 // pred_fallthru
    _

// kernel: base_gnn_forward.3
$region0: #{base_gnn_forward.3}
  #allocation0 [shape = 'u32[]', space=smem, size = 0x4, offset = 0x4, fixed_abs, tag = 'smem constant byte address 0x4 - core index']
  #allocation1 [shape = 'u32[144,128]{1,0:T(1,128)}', space=vmem, size = 0x12000, scoped, tag = 'internal scratch']
  #allocation2 [shape = 'f32[128,128]{1,0:T(8,128)}', space=vmem, size = 0x10000, scoped, tag = 'scratch operand']
  %s0 = inlined_call_operand.vmem [shape: bf16[128,128], index: 0, kind: input, shape index: {}]
  %s1 = inlined_call_operand.vmem [shape: bf16[128,128], index: 1, kind: input, shape index: {}]
  %s2 = inlined_call_operand.vmem [shape: f32[1,128], index: 2, kind: input, shape index: {}]
  %s3 = inlined_call_operand.vmem [shape: bf16[128,128], index: 3, kind: input, shape index: {}]
  %s4 = inlined_call_operand.vmem [shape: f32[1,128], index: 4, kind: input, shape index: {}]
  %s5 = inlined_call_operand.vmem [shape: f32[128,128], index: 5, kind: output, shape index: {}]
  %s6 = sld [smem:[#allocation0]]
  $region38: #{base_gnn_forward.3} parent=0
    _
  %s8 = ssub.s32 1, %s6
  %s9 = scalar_select 0, %s8, %s6
  // Predicated region
  $region2: #{base_gnn_forward.3} parent=0 // pred_check
    _
  $region3: #{base_gnn_forward.3} parent=0 // pred_check_branch
    %11 = sbr.rel (0) target = $region5
  $region4: #{base_gnn_forward.3} parent=0 // pred_region
    _
  $region5: #{base_gnn_forward.3} parent=0 // pred_fallthru
    _
  // Predicated region
  $region6: #{base_gnn_forward.3} parent=0 // pred_check
    _
  $region7: #{base_gnn_forward.3} parent=0 // pred_check_branch
    %13 = sbr.rel (0) target = $region9
  $region8: #{base_gnn_forward.3} parent=0 // pred_region
    _
  $region9: #{base_gnn_forward.3} parent=0 // pred_fallthru
    _
  // Predicated region
  $region10: #{base_gnn_forward.3} parent=0 // pred_check
    _
  $region11: #{base_gnn_forward.3} parent=0 // pred_check_branch
    %15 = sbr.rel (0) target = $region13
  $region12: #{base_gnn_forward.3} parent=0 // pred_region
    _
  $region13: #{base_gnn_forward.3} parent=0 // pred_fallthru
    _
  // Predicated region
  $region14: #{base_gnn_forward.3} parent=0 // pred_check
    _
  $region15: #{base_gnn_forward.3} parent=0 // pred_check_branch
    %17 = sbr.rel (0) target = $region17
  $region16: #{base_gnn_forward.3} parent=0 // pred_region
    _
  $region17: #{base_gnn_forward.3} parent=0 // pred_fallthru
    _
  // Predicated region
  $region18: #{base_gnn_forward.3} parent=0 // pred_check
    _
  $region19: #{base_gnn_forward.3} parent=0 // pred_check_branch
    %19 = sbr.rel (0) target = $region21
  $region20: #{base_gnn_forward.3} parent=0 // pred_region
    _
  $region21: #{base_gnn_forward.3} parent=0 // pred_fallthru
    _
  %p21 = scmp.eq.s32.totalorder 0, 0
  // Predicated region
  $region22: #{base_gnn_forward.3} parent=0 // pred_check
    %p22 = pneg %p21
  $region23: #{base_gnn_forward.3} parent=0 // pred_check_branch
    %24 = sbr.rel (%p22) target = $region25
  $region24: #{base_gnn_forward.3} parent=0 // pred_region
    %25 = vst [vmem:[#allocation2] sm:$0xff] 0.0
    %26 = vst [vmem:[#allocation2 + $0x8] sm:$0xff] 0.0
    %27 = vst [vmem:[#allocation2 + $0x10] sm:$0xff] 0.0
    %28 = vst [vmem:[#allocation2 + $0x18] sm:$0xff] 0.0
    %29 = vst [vmem:[#allocation2 + $0x20] sm:$0xff] 0.0
    %30 = vst [vmem:[#allocation2 + $0x28] sm:$0xff] 0.0
    %31 = vst [vmem:[#allocation2 + $0x30] sm:$0xff] 0.0
    %32 = vst [vmem:[#allocation2 + $0x38] sm:$0xff] 0.0
    %33 = vst [vmem:[#allocation2 + $0x40] sm:$0xff] 0.0
    %34 = vst [vmem:[#allocation2 + $0x48] sm:$0xff] 0.0
    %35 = vst [vmem:[#allocation2 + $0x50] sm:$0xff] 0.0
    %36 = vst [vmem:[#allocation2 + $0x58] sm:$0xff] 0.0
    %37 = vst [vmem:[#allocation2 + $0x60] sm:$0xff] 0.0
    %38 = vst [vmem:[#allocation2 + $0x68] sm:$0xff] 0.0
    %39 = vst [vmem:[#allocation2 + $0x70] sm:$0xff] 0.0
    %40 = vst [vmem:[#allocation2 + $0x78] sm:$0xff] 0.0
  $region25: #{base_gnn_forward.3} parent=0 // pred_fallthru
    _
  %v41 = vld [vmem:[#allocation2] sm:$0xff]
  %v42 = vld [vmem:[#allocation2 + $0x8] sm:$0xff]
  %v43 = vld [vmem:[#allocation2 + $0x10] sm:$0xff]
  %v44 = vld [vmem:[#allocation2 + $0x18] sm:$0xff]
  %v45 = vld [vmem:[#allocation2 + $0x20] sm:$0xff]
  %v46 = vld [vmem:[#allocation2 + $0x28] sm:$0xff]
  %v47 = vld [vmem:[#allocation2 + $0x30] sm:$0xff]
  %v48 = vld [vmem:[#allocation2 + $0x38] sm:$0xff]
  %v49 = vld [vmem:[#allocation2 + $0x40] sm:$0xff]
  %v50 = vld [vmem:[#allocation2 + $0x48] sm:$0xff]
  %v51 = vld [vmem:[#allocation2 + $0x50] sm:$0xff]
  %v52 = vld [vmem:[#allocation2 + $0x58] sm:$0xff]
  %v53 = vld [vmem:[#allocation2 + $0x60] sm:$0xff]
  %v54 = vld [vmem:[#allocation2 + $0x68] sm:$0xff]
  %v55 = vld [vmem:[#allocation2 + $0x70] sm:$0xff]
  %v56 = vld [vmem:[#allocation2 + $0x78] sm:$0xff]
  %v57 = vld [vmem:[%s0] sm:$0xf]
  %v58 = vld [vmem:[%s0 + $0x4] sm:$0xf]
  %v59 = vld [vmem:[%s0 + $0x8] sm:$0xf]
  %v60 = vld [vmem:[%s0 + $0xc] sm:$0xf]
  %v61 = vld [vmem:[%s0 + $0x10] sm:$0xf]
  %v62 = vld [vmem:[%s0 + $0x14] sm:$0xf]
  %v63 = vld [vmem:[%s0 + $0x18] sm:$0xf]
  %v64 = vld [vmem:[%s0 + $0x1c] sm:$0xf]
  %v65 = vld [vmem:[%s0 + $0x20] sm:$0xf]
  %v66 = vld [vmem:[%s0 + $0x24] sm:$0xf]
  %v67 = vld [vmem:[%s0 + $0x28] sm:$0xf]
  %v68 = vld [vmem:[%s0 + $0x2c] sm:$0xf]
  %v69 = vld [vmem:[%s0 + $0x30] sm:$0xf]
  %v70 = vld [vmem:[%s0 + $0x34] sm:$0xf]
  %v71 = vld [vmem:[%s0 + $0x38] sm:$0xf]
  %v72 = vld [vmem:[%s0 + $0x3c] sm:$0xf]
  %v73 = vld [vmem:[%s1] sm:$0xf]
  %v74 = vld [vmem:[%s1 + $0x4] sm:$0xf]
  %v75 = vld [vmem:[%s1 + $0x8] sm:$0xf]
  %v76 = vld [vmem:[%s1 + $0xc] sm:$0xf]
  %v77 = vld [vmem:[%s1 + $0x10] sm:$0xf]
  %v78 = vld [vmem:[%s1 + $0x14] sm:$0xf]
  %v79 = vld [vmem:[%s1 + $0x18] sm:$0xf]
  %v80 = vld [vmem:[%s1 + $0x1c] sm:$0xf]
  %v81 = vld [vmem:[%s1 + $0x20] sm:$0xf]
  %v82 = vld [vmem:[%s1 + $0x24] sm:$0xf]
  %v83 = vld [vmem:[%s1 + $0x28] sm:$0xf]
  %v84 = vld [vmem:[%s1 + $0x2c] sm:$0xf]
  %v85 = vld [vmem:[%s1 + $0x30] sm:$0xf]
  %v86 = vld [vmem:[%s1 + $0x34] sm:$0xf]
  %v87 = vld [vmem:[%s1 + $0x38] sm:$0xf]
  %v88 = vld [vmem:[%s1 + $0x3c] sm:$0xf]
  %v105 = vunpack.c.l.b16 %v57
  %v106 = vunpack.c.l.b16 %v58
  %v107 = vunpack.c.l.b16 %v59
  %v108 = vunpack.c.l.b16 %v60
  %v109 = vunpack.c.l.b16 %v61
  %v110 = vunpack.c.l.b16 %v62
  %v111 = vunpack.c.l.b16 %v63
  %v112 = vunpack.c.l.b16 %v64
  %v113 = vunpack.c.l.b16 %v65
  %v114 = vunpack.c.l.b16 %v66
  %v115 = vunpack.c.l.b16 %v67
  %v116 = vunpack.c.l.b16 %v68
  %v117 = vunpack.c.l.b16 %v69
  %v118 = vunpack.c.l.b16 %v70
  %v119 = vunpack.c.l.b16 %v71
  %v120 = vunpack.c.l.b16 %v72
  %v121 = vpack.c.b16 %v106, %v105
  %v122 = vpack.c.b16 %v108, %v107
  %v123 = vpack.c.b16 %v110, %v109
  %v124 = vpack.c.b16 %v112, %v111
  %v125 = vpack.c.b16 %v114, %v113
  %v126 = vpack.c.b16 %v116, %v115
  %v127 = vpack.c.b16 %v118, %v117
  %v128 = vpack.c.b16 %v120, %v119
  %v153 = vunpack.c.l.b16 %v73
  %v154 = vunpack.c.l.b16 %v74
  %v155 = vunpack.c.l.b16 %v75
  %v156 = vunpack.c.l.b16 %v76
  %v157 = vunpack.c.l.b16 %v77
  %v158 = vunpack.c.l.b16 %v78
  %v159 = vunpack.c.l.b16 %v79
  %v160 = vunpack.c.l.b16 %v80
  %v161 = vunpack.c.l.b16 %v81
  %v162 = vunpack.c.l.b16 %v82
  %v163 = vunpack.c.l.b16 %v83
  %v164 = vunpack.c.l.b16 %v84
  %v165 = vunpack.c.l.b16 %v85
  %v166 = vunpack.c.l.b16 %v86
  %v167 = vunpack.c.l.b16 %v87
  %v168 = vunpack.c.l.b16 %v88
  %v169 = vpack.c.b16 %v154, %v153
  %v170 = vpack.c.b16 %v156, %v155
  %v171 = vpack.c.b16 %v158, %v157
  %v172 = vpack.c.b16 %v160, %v159
  %v173 = vpack.c.b16 %v162, %v161
  %v174 = vpack.c.b16 %v164, %v163
  %v175 = vpack.c.b16 %v166, %v165
  %v176 = vpack.c.b16 %v168, %v167
  %185 = vmatprep.subr.bf16.mxu0 0
  %186 = vmatpush1.bf16.msra.mxu0 %v169
  %187 = vmatprep.subr.bf16.mxu0 0
  %188 = vmatpush1.bf16.msra.mxu0 %v170
  %189 = vmatprep.subr.bf16.mxu0 0
  %190 = vmatpush1.bf16.msra.mxu0 %v171
  %191 = vmatprep.subr.bf16.mxu0 0
  %192 = vmatpush1.bf16.msra.mxu0 %v172
  %193 = vmatprep.subr.bf16.mxu0 0
  %194 = vmatpush1.bf16.msra.mxu0 %v173
  %195 = vmatprep.subr.bf16.mxu0 0
  %196 = vmatpush1.bf16.msra.mxu0 %v174
  %197 = vmatprep.subr.bf16.mxu0 0
  %198 = vmatpush1.bf16.msra.mxu0 %v175
  %199 = vmatprep.subr.bf16.mxu0 0
  %200 = vmatpush1.bf16.msra.mxu0 %v176
  %201 = vmatprep.subr.bf16.mxu0 0
  %202 = vmatpush1.bf16.msra.mxu0 0
  %203 = vmatprep.subr.bf16.mxu0 0
  %204 = vmatpush1.bf16.msra.mxu0 0
  %205 = vmatprep.subr.bf16.mxu0 0
  %206 = vmatpush1.bf16.msra.mxu0 0
  %207 = vmatprep.subr.bf16.mxu0 0
  %208 = vmatpush1.bf16.msra.mxu0 0
  %209 = vmatprep.subr.bf16.mxu0 0
  %210 = vmatpush1.bf16.msra.mxu0 0
  %211 = vmatprep.subr.bf16.mxu0 0
  %212 = vmatpush1.bf16.msra.mxu0 0
  %213 = vmatprep.subr.bf16.mxu0 0
  %214 = vmatpush1.bf16.msra.mxu0 0
  %215 = vmatprep.subr.bf16.mxu0 0
  %216 = vmatpush1.bf16.msra.mxu0 0
  %217 = vmatprep.mubr.bf16.mxu0 0
  %218 = vmatmul.mubr.bf16.gmra.mrb[0].mxu0 %v121
  %v219 = vpop.f32.mrb[0].mxu0
  %v220 = vadd.f32 0.0, %v219
  %v221 = vpop.f32.mrb[0].mxu0
  %v222 = vpop.f32.mrb[0].mxu0
  %v223 = vadd.f32 0.0, %v222
  %v224 = vpop.f32.mrb[0].mxu0
  %225 = vmatprep.mubr.bf16.mxu0 0
  %226 = vmatmul.mubr.bf16.gmra.mrb[0].mxu0 %v122
  %v227 = vpop.f32.mrb[0].mxu0
  %v228 = vadd.f32 0.0, %v227
  %v229 = vpop.f32.mrb[0].mxu0
  %v230 = vpop.f32.mrb[0].mxu0
  %v231 = vadd.f32 0.0, %v230
  %v232 = vpop.f32.mrb[0].mxu0
  %233 = vmatprep.mubr.bf16.mxu0 0
  %234 = vmatmul.mubr.bf16.gmra.mrb[0].mxu0 %v123
  %v235 = vpop.f32.mrb[0].mxu0
  %v236 = vadd.f32 0.0, %v235
  %v237 = vpop.f32.mrb[0].mxu0
  %v238 = vpop.f32.mrb[0].mxu0
  %v239 = vadd.f32 0.0, %v238
  %v240 = vpop.f32.mrb[0].mxu0
  %241 = vmatprep.mubr.bf16.mxu0 0
  %242 = vmatmul.mubr.bf16.gmra.mrb[0].mxu0 %v124
  %v243 = vpop.f32.mrb[0].mxu0
  %v244 = vadd.f32 0.0, %v243
  %v245 = vpop.f32.mrb[0].mxu0
  %v246 = vpop.f32.mrb[0].mxu0
  %v247 = vadd.f32 0.0, %v246
  %v248 = vpop.f32.mrb[0].mxu0
  %249 = vmatprep.mubr.bf16.mxu0 0
  %250 = vmatmul.mubr.bf16.gmra.mrb[0].mxu0 %v125
  %v251 = vpop.f32.mrb[0].mxu0
  %v252 = vadd.f32 0.0, %v251
  %v253 = vpop.f32.mrb[0].mxu0
  %v254 = vpop.f32.mrb[0].mxu0
  %v255 = vadd.f32 0.0, %v254
  %v256 = vpop.f32.mrb[0].mxu0
  %257 = vmatprep.mubr.bf16.mxu0 0
  %258 = vmatmul.mubr.bf16.gmra.mrb[0].mxu0 %v126
  %v259 = vpop.f32.mrb[0].mxu0
  %v260 = vadd.f32 0.0, %v259
  %v261 = vpop.f32.mrb[0].mxu0
  %v262 = vpop.f32.mrb[0].mxu0
  %v263 = vadd.f32 0.0, %v262
  %v264 = vpop.f32.mrb[0].mxu0
  %265 = vmatprep.mubr.bf16.mxu0 0
  %266 = vmatmul.mubr.bf16.gmra.mrb[0].mxu0 %v127
  %v267 = vpop.f32.mrb[0].mxu0
  %v268 = vadd.f32 0.0, %v267
  %v269 = vpop.f32.mrb[0].mxu0
  %v270 = vpop.f32.mrb[0].mxu0
  %v271 = vadd.f32 0.0, %v270
  %v272 = vpop.f32.mrb[0].mxu0
  %273 = vmatprep.mubr.bf16.mxu0 0
  %274 = vmatmul.mubr.bf16.gmra.mrb[0].mxu0 %v128
  %v275 = vpop.f32.mrb[0].mxu0
  %v276 = vadd.f32 0.0, %v275
  %v277 = vpop.f32.mrb[0].mxu0
  %v278 = vpop.f32.mrb[0].mxu0
  %v279 = vadd.f32 0.0, %v278
  %v280 = vpop.f32.mrb[0].mxu0
  %281 = vdwg.mxu0
  %v282 = vadd.f32 %v41, %v220
  %v283 = vadd.f32 %v42, %v223
  %v284 = vadd.f32 %v43, %v228
  %v285 = vadd.f32 %v44, %v231
  %v286 = vadd.f32 %v45, %v236
  %v287 = vadd.f32 %v46, %v239
  %v288 = vadd.f32 %v47, %v244
  %v289 = vadd.f32 %v48, %v247
  %v290 = vadd.f32 %v49, %v252
  %v291 = vadd.f32 %v50, %v255
  %v292 = vadd.f32 %v51, %v260
  %v293 = vadd.f32 %v52, %v263
  %v294 = vadd.f32 %v53, %v268
  %v295 = vadd.f32 %v54, %v271
  %v296 = vadd.f32 %v55, %v276
  %v297 = vadd.f32 %v56, %v279
  %298 = vst [vmem:[#allocation2] sm:$0xff] %v282
  %299 = vst [vmem:[#allocation2 + $0x8] sm:$0xff] %v283
  %300 = vst [vmem:[#allocation2 + $0x10] sm:$0xff] %v284
  %301 = vst [vmem:[#allocation2 + $0x18] sm:$0xff] %v285
  %302 = vst [vmem:[#allocation2 + $0x20] sm:$0xff] %v286
  %303 = vst [vmem:[#allocation2 + $0x28] sm:$0xff] %v287
  %304 = vst [vmem:[#allocation2 + $0x30] sm:$0xff] %v288
  %305 = vst [vmem:[#allocation2 + $0x38] sm:$0xff] %v289
  %306 = vst [vmem:[#allocation2 + $0x40] sm:$0xff] %v290
  %307 = vst [vmem:[#allocation2 + $0x48] sm:$0xff] %v291
  %308 = vst [vmem:[#allocation2 + $0x50] sm:$0xff] %v292
  %309 = vst [vmem:[#allocation2 + $0x58] sm:$0xff] %v293
  %310 = vst [vmem:[#allocation2 + $0x60] sm:$0xff] %v294
  %311 = vst [vmem:[#allocation2 + $0x68] sm:$0xff] %v295
  %312 = vst [vmem:[#allocation2 + $0x70] sm:$0xff] %v296
  %313 = vst [vmem:[#allocation2 + $0x78] sm:$0xff] %v297
  // Predicated region
  $region26: #{base_gnn_forward.3} parent=0 // pred_check
    %p314 = pneg %p21
  $region27: #{base_gnn_forward.3} parent=0 // pred_check_branch
    %316 = sbr.rel (%p314) target = $region29
  $region28: #{base_gnn_forward.3} parent=0 // pred_region
    %v317 = vld [vmem:[#allocation2] sm:$0xff]
    %v318 = vld [vmem:[#allocation2 + $0x8] sm:$0xff]
    %v319 = vld [vmem:[#allocation2 + $0x10] sm:$0xff]
    %v320 = vld [vmem:[#allocation2 + $0x18] sm:$0xff]
    %v321 = vld [vmem:[#allocation2 + $0x20] sm:$0xff]
    %v322 = vld [vmem:[#allocation2 + $0x28] sm:$0xff]
    %v323 = vld [vmem:[#allocation2 + $0x30] sm:$0xff]
    %v324 = vld [vmem:[#allocation2 + $0x38] sm:$0xff]
    %v325 = vld [vmem:[#allocation2 + $0x40] sm:$0xff]
    %v326 = vld [vmem:[#allocation2 + $0x48] sm:$0xff]
    %v327 = vld [vmem:[#allocation2 + $0x50] sm:$0xff]
    %v328 = vld [vmem:[#allocation2 + $0x58] sm:$0xff]
    %v329 = vld [vmem:[#allocation2 + $0x60] sm:$0xff]
    %v330 = vld [vmem:[#allocation2 + $0x68] sm:$0xff]
    %v331 = vld [vmem:[#allocation2 + $0x70] sm:$0xff]
    %v332 = vld [vmem:[#allocation2 + $0x78] sm:$0xff]
    %v333 = vld [vmem:[%s2] sm:$0x1]
    %v335 = vlaneseq
    %v336 = vshrl.u32 %v335, 7
    %v337 = vsub.s32 0, %v336
    %v338 = vrot.slane %v333, %v337
    %v340 = vadd.f32 %v317, %v338
    %v341 = vadd.f32 %v318, %v338
    %v342 = vadd.f32 %v319, %v338
    %v343 = vadd.f32 %v320, %v338
    %v344 = vadd.f32 %v321, %v338
    %v345 = vadd.f32 %v322, %v338
    %v346 = vadd.f32 %v323, %v338
    %v347 = vadd.f32 %v324, %v338
    %v348 = vadd.f32 %v325, %v338
    %v349 = vadd.f32 %v326, %v338
    %v350 = vadd.f32 %v327, %v338
    %v351 = vadd.f32 %v328, %v338
    %v352 = vadd.f32 %v329, %v338
    %v353 = vadd.f32 %v330, %v338
    %v354 = vadd.f32 %v331, %v338
    %v355 = vadd.f32 %v332, %v338
    %v356 = vmax.f32 %v340, 0.0
    %v357 = vmax.f32 %v341, 0.0
    %v358 = vmax.f32 %v342, 0.0
    %v359 = vmax.f32 %v343, 0.0
    %v360 = vmax.f32 %v344, 0.0
    %v361 = vmax.f32 %v345, 0.0
    %v362 = vmax.f32 %v346, 0.0
    %v363 = vmax.f32 %v347, 0.0
    %v364 = vmax.f32 %v348, 0.0
    %v365 = vmax.f32 %v349, 0.0
    %v366 = vmax.f32 %v350, 0.0
    %v367 = vmax.f32 %v351, 0.0
    %v368 = vmax.f32 %v352, 0.0
    %v369 = vmax.f32 %v353, 0.0
    %v370 = vmax.f32 %v354, 0.0
    %v371 = vmax.f32 %v355, 0.0
    %v372 = vpack.c.bf16 %v357, %v356
    %v373 = vpack.c.bf16 %v359, %v358
    %v374 = vpack.c.bf16 %v361, %v360
    %v375 = vpack.c.bf16 %v363, %v362
    %v376 = vpack.c.bf16 %v365, %v364
    %v377 = vpack.c.bf16 %v367, %v366
    %v378 = vpack.c.bf16 %v369, %v368
    %v379 = vpack.c.bf16 %v371, %v370
    %v380 = vld [vmem:[%s3] sm:$0xf]
    %v381 = vld [vmem:[%s3 + $0x4] sm:$0xf]
    %v382 = vld [vmem:[%s3 + $0x8] sm:$0xf]
    %v383 = vld [vmem:[%s3 + $0xc] sm:$0xf]
    %v384 = vld [vmem:[%s3 + $0x10] sm:$0xf]
    %v385 = vld [vmem:[%s3 + $0x14] sm:$0xf]
    %v386 = vld [vmem:[%s3 + $0x18] sm:$0xf]
    %v387 = vld [vmem:[%s3 + $0x1c] sm:$0xf]
    %v388 = vld [vmem:[%s3 + $0x20] sm:$0xf]
    %v389 = vld [vmem:[%s3 + $0x24] sm:$0xf]
    %v390 = vld [vmem:[%s3 + $0x28] sm:$0xf]
    %v391 = vld [vmem:[%s3 + $0x2c] sm:$0xf]
    %v392 = vld [vmem:[%s3 + $0x30] sm:$0xf]
    %v393 = vld [vmem:[%s3 + $0x34] sm:$0xf]
    %v394 = vld [vmem:[%s3 + $0x38] sm:$0xf]
    %v395 = vld [vmem:[%s3 + $0x3c] sm:$0xf]
    %v396 = vld [vmem:[%s4] sm:$0x1]
    %v398 = vlaneseq
    %v399 = vshrl.u32 %v398, 7
    %v400 = vsub.s32 0, %v399
    %v401 = vrot.slane %v396, %v400
    %v419 = vunpack.c.l.b16 %v380
    %v420 = vunpack.c.l.b16 %v381
    %v421 = vunpack.c.l.b16 %v382
    %v422 = vunpack.c.l.b16 %v383
    %v423 = vunpack.c.l.b16 %v384
    %v424 = vunpack.c.l.b16 %v385
    %v425 = vunpack.c.l.b16 %v386
    %v426 = vunpack.c.l.b16 %v387
    %v427 = vunpack.c.l.b16 %v388
    %v428 = vunpack.c.l.b16 %v389
    %v429 = vunpack.c.l.b16 %v390
    %v430 = vunpack.c.l.b16 %v391
    %v431 = vunpack.c.l.b16 %v392
    %v432 = vunpack.c.l.b16 %v393
    %v433 = vunpack.c.l.b16 %v394
    %v434 = vunpack.c.l.b16 %v395
    %v435 = vpack.c.b16 %v420, %v419
    %v436 = vpack.c.b16 %v422, %v421
    %v437 = vpack.c.b16 %v424, %v423
    %v438 = vpack.c.b16 %v426, %v425
    %v439 = vpack.c.b16 %v428, %v427
    %v440 = vpack.c.b16 %v430, %v429
    %v441 = vpack.c.b16 %v432, %v431
    %v442 = vpack.c.b16 %v434, %v433
    %451 = vmatprep.subr.bf16.mxu0 0
    %452 = vmatpush1.bf16.msra.mxu0 %v435
    %453 = vmatprep.subr.bf16.mxu0 0
    %454 = vmatpush1.bf16.msra.mxu0 %v436
    %455 = vmatprep.subr.bf16.mxu0 0
    %456 = vmatpush1.bf16.msra.mxu0 %v437
    %457 = vmatprep.subr.bf16.mxu0 0
    %458 = vmatpush1.bf16.msra.mxu0 %v438
    %459 = vmatprep.subr.bf16.mxu0 0
    %460 = vmatpush1.bf16.msra.mxu0 %v439
    %461 = vmatprep.subr.bf16.mxu0 0
    %462 = vmatpush1.bf16.msra.mxu0 %v440
    %463 = vmatprep.subr.bf16.mxu0 0
    %464 = vmatpush1.bf16.msra.mxu0 %v441
    %465 = vmatprep.subr.bf16.mxu0 0
    %466 = vmatpush1.bf16.msra.mxu0 %v442
    %467 = vmatprep.subr.bf16.mxu0 0
    %468 = vmatpush1.bf16.msra.mxu0 0
    %469 = vmatprep.subr.bf16.mxu0 0
    %470 = vmatpush1.bf16.msra.mxu0 0
    %471 = vmatprep.subr.bf16.mxu0 0
    %472 = vmatpush1.bf16.msra.mxu0 0
    %473 = vmatprep.subr.bf16.mxu0 0
    %474 = vmatpush1.bf16.msra.mxu0 0
    %475 = vmatprep.subr.bf16.mxu0 0
    %476 = vmatpush1.bf16.msra.mxu0 0
    %477 = vmatprep.subr.bf16.mxu0 0
    %478 = vmatpush1.bf16.msra.mxu0 0
    %479 = vmatprep.subr.bf16.mxu0 0
    %480 = vmatpush1.bf16.msra.mxu0 0
    %481 = vmatprep.subr.bf16.mxu0 0
    %482 = vmatpush1.bf16.msra.mxu0 0
    %483 = vmatprep.mubr.bf16.mxu0 0
    %484 = vmatmul.mubr.bf16.gmra.mrb[0].mxu0 %v372
    %v485 = vpop.f32.mrb[0].mxu0
    %v486 = vadd.f32 %v401, %v485
    %v487 = vpop.f32.mrb[0].mxu0
    %v488 = vpop.f32.mrb[0].mxu0
    %v489 = vadd.f32 %v401, %v488
    %v490 = vpop.f32.mrb[0].mxu0
    %491 = vmatprep.mubr.bf16.mxu0 0
    %492 = vmatmul.mubr.bf16.gmra.mrb[0].mxu0 %v373
    %v493 = vpop.f32.mrb[0].mxu0
    %v494 = vadd.f32 %v401, %v493
    %v495 = vpop.f32.mrb[0].mxu0
    %v496 = vpop.f32.mrb[0].mxu0
    %v497 = vadd.f32 %v401, %v496
    %v498 = vpop.f32.mrb[0].mxu0
    %499 = vmatprep.mubr.bf16.mxu0 0
    %500 = vmatmul.mubr.bf16.gmra.mrb[0].mxu0 %v374
    %v501 = vpop.f32.mrb[0].mxu0
    %v502 = vadd.f32 %v401, %v501
    %v503 = vpop.f32.mrb[0].mxu0
    %v504 = vpop.f32.mrb[0].mxu0
    %v505 = vadd.f32 %v401, %v504
    %v506 = vpop.f32.mrb[0].mxu0
    %507 = vmatprep.mubr.bf16.mxu0 0
    %508 = vmatmul.mubr.bf16.gmra.mrb[0].mxu0 %v375
    %v509 = vpop.f32.mrb[0].mxu0
    %v510 = vadd.f32 %v401, %v509
    %v511 = vpop.f32.mrb[0].mxu0
    %v512 = vpop.f32.mrb[0].mxu0
    %v513 = vadd.f32 %v401, %v512
    %v514 = vpop.f32.mrb[0].mxu0
    %515 = vmatprep.mubr.bf16.mxu0 0
    %516 = vmatmul.mubr.bf16.gmra.mrb[0].mxu0 %v376
    %v517 = vpop.f32.mrb[0].mxu0
    %v518 = vadd.f32 %v401, %v517
    %v519 = vpop.f32.mrb[0].mxu0
    %v520 = vpop.f32.mrb[0].mxu0
    %v521 = vadd.f32 %v401, %v520
    %v522 = vpop.f32.mrb[0].mxu0
    %523 = vmatprep.mubr.bf16.mxu0 0
    %524 = vmatmul.mubr.bf16.gmra.mrb[0].mxu0 %v377
    %v525 = vpop.f32.mrb[0].mxu0
    %v526 = vadd.f32 %v401, %v525
    %v527 = vpop.f32.mrb[0].mxu0
    %v528 = vpop.f32.mrb[0].mxu0
    %v529 = vadd.f32 %v401, %v528
    %v530 = vpop.f32.mrb[0].mxu0
    %531 = vmatprep.mubr.bf16.mxu0 0
    %532 = vmatmul.mubr.bf16.gmra.mrb[0].mxu0 %v378
    %v533 = vpop.f32.mrb[0].mxu0
    %v534 = vadd.f32 %v401, %v533
    %v535 = vpop.f32.mrb[0].mxu0
    %v536 = vpop.f32.mrb[0].mxu0
    %v537 = vadd.f32 %v401, %v536
    %v538 = vpop.f32.mrb[0].mxu0
    %539 = vmatprep.mubr.bf16.mxu0 0
    %540 = vmatmul.mubr.bf16.gmra.mrb[0].mxu0 %v379
    %v541 = vpop.f32.mrb[0].mxu0
    %v542 = vadd.f32 %v401, %v541
    %v543 = vpop.f32.mrb[0].mxu0
    %v544 = vpop.f32.mrb[0].mxu0
    %v545 = vadd.f32 %v401, %v544
    %v546 = vpop.f32.mrb[0].mxu0
    %547 = vdwg.mxu0
    %548 = vmax.xlane.f32.xlu0 %v486
    %v549 = vpop.xlane.xlu0 %548
    %550 = vmax.xlane.f32.xlu0 %v489
    %v551 = vpop.xlane.xlu0 %550
    %552 = vmax.xlane.f32.xlu0 %v494
    %v553 = vpop.xlane.xlu0 %552
    %554 = vmax.xlane.f32.xlu0 %v497
    %v555 = vpop.xlane.xlu0 %554
    %556 = vmax.xlane.f32.xlu0 %v502
    %v557 = vpop.xlane.xlu0 %556
    %558 = vmax.xlane.f32.xlu0 %v505
    %v559 = vpop.xlane.xlu0 %558
    %560 = vmax.xlane.f32.xlu0 %v510
    %v561 = vpop.xlane.xlu0 %560
    %562 = vmax.xlane.f32.xlu0 %v513
    %v563 = vpop.xlane.xlu0 %562
    %564 = vmax.xlane.f32.xlu0 %v518
    %v565 = vpop.xlane.xlu0 %564
    %566 = vmax.xlane.f32.xlu0 %v521
    %v567 = vpop.xlane.xlu0 %566
    %568 = vmax.xlane.f32.xlu0 %v526
    %v569 = vpop.xlane.xlu0 %568
    %570 = vmax.xlane.f32.xlu0 %v529
    %v571 = vpop.xlane.xlu0 %570
    %572 = vmax.xlane.f32.xlu0 %v534
    %v573 = vpop.xlane.xlu0 %572
    %574 = vmax.xlane.f32.xlu0 %v537
    %v575 = vpop.xlane.xlu0 %574
    %576 = vmax.xlane.f32.xlu0 %v542
    %v577 = vpop.xlane.xlu0 %576
    %578 = vmax.xlane.f32.xlu0 %v545
    %v579 = vpop.xlane.xlu0 %578
    %v580 = vsub.f32 %v486, %v549
    %v581 = vsub.f32 %v489, %v551
    %v582 = vsub.f32 %v494, %v553
    %v583 = vsub.f32 %v497, %v555
    %v584 = vsub.f32 %v502, %v557
    %v585 = vsub.f32 %v505, %v559
    %v586 = vsub.f32 %v510, %v561
    %v587 = vsub.f32 %v513, %v563
    %v588 = vsub.f32 %v518, %v565
    %v589 = vsub.f32 %v521, %v567
    %v590 = vsub.f32 %v526, %v569
    %v591 = vsub.f32 %v529, %v571
    %v592 = vsub.f32 %v534, %v573
    %v593 = vsub.f32 %v537, %v575
    %v594 = vsub.f32 %v542, %v577
    %v595 = vsub.f32 %v545, %v579
    %v596 = vmul.f32 %v580, 1.442695
    %v597 = vpow.pop %v596
    %v598 = vmul.f32 %v581, 1.442695
    %v599 = vpow.pop %v598
    %v600 = vmul.f32 %v582, 1.442695
    %v601 = vpow.pop %v600
    %v602 = vmul.f32 %v583, 1.442695
    %v603 = vpow.pop %v602
    %v604 = vmul.f32 %v584, 1.442695
    %v605 = vpow.pop %v604
    %v606 = vmul.f32 %v585, 1.442695
    %v607 = vpow.pop %v606
    %v608 = vmul.f32 %v586, 1.442695
    %v609 = vpow.pop %v608
    %v610 = vmul.f32 %v587, 1.442695
    %v611 = vpow.pop %v610
    %v612 = vmul.f32 %v588, 1.442695
    %v613 = vpow.pop %v612
    %v614 = vmul.f32 %v589, 1.442695
    %v615 = vpow.pop %v614
    %v616 = vmul.f32 %v590, 1.442695
    %v617 = vpow.pop %v616
    %v618 = vmul.f32 %v591, 1.442695
    %v619 = vpow.pop %v618
    %v620 = vmul.f32 %v592, 1.442695
    %v621 = vpow.pop %v620
    %v622 = vmul.f32 %v593, 1.442695
    %v623 = vpow.pop %v622
    %v624 = vmul.f32 %v594, 1.442695
    %v625 = vpow.pop %v624
    %v626 = vmul.f32 %v595, 1.442695
    %v627 = vpow.pop %v626
    %628 = vadd.xlane.f32.xlu0 %v597
    %v629 = vpop.xlane.xlu0 %628
    %630 = vadd.xlane.f32.xlu0 %v599
    %v631 = vpop.xlane.xlu0 %630
    %632 = vadd.xlane.f32.xlu0 %v601
    %v633 = vpop.xlane.xlu0 %632
    %634 = vadd.xlane.f32.xlu0 %v603
    %v635 = vpop.xlane.xlu0 %634
    %636 = vadd.xlane.f32.xlu0 %v605
    %v637 = vpop.xlane.xlu0 %636
    %638 = vadd.xlane.f32.xlu0 %v607
    %v639 = vpop.xlane.xlu0 %638
    %640 = vadd.xlane.f32.xlu0 %v609
    %v641 = vpop.xlane.xlu0 %640
    %642 = vadd.xlane.f32.xlu0 %v611
    %v643 = vpop.xlane.xlu0 %642
    %644 = vadd.xlane.f32.xlu0 %v613
    %v645 = vpop.xlane.xlu0 %644
    %646 = vadd.xlane.f32.xlu0 %v615
    %v647 = vpop.xlane.xlu0 %646
    %648 = vadd.xlane.f32.xlu0 %v617
    %v649 = vpop.xlane.xlu0 %648
    %650 = vadd.xlane.f32.xlu0 %v619
    %v651 = vpop.xlane.xlu0 %650
    %652 = vadd.xlane.f32.xlu0 %v621
    %v653 = vpop.xlane.xlu0 %652
    %654 = vadd.xlane.f32.xlu0 %v623
    %v655 = vpop.xlane.xlu0 %654
    %656 = vadd.xlane.f32.xlu0 %v625
    %v657 = vpop.xlane.xlu0 %656
    %658 = vadd.xlane.f32.xlu0 %v627
    %v659 = vpop.xlane.xlu0 %658
    %v660 = vlog2.pop %v629
    %v661 = vmul.f32 %v660, 0.6931472
    %v662 = vlog2.pop %v631
    %v663 = vmul.f32 %v662, 0.6931472
    %v664 = vlog2.pop %v633
    %v665 = vmul.f32 %v664, 0.6931472
    %v666 = vlog2.pop %v635
    %v667 = vmul.f32 %v666, 0.6931472
    %v668 = vlog2.pop %v637
    %v669 = vmul.f32 %v668, 0.6931472
    %v670 = vlog2.pop %v639
    %v671 = vmul.f32 %v670, 0.6931472
    %v672 = vlog2.pop %v641
    %v673 = vmul.f32 %v672, 0.6931472
    %v674 = vlog2.pop %v643
    %v675 = vmul.f32 %v674, 0.6931472
    %v676 = vlog2.pop %v645
    %v677 = vmul.f32 %v676, 0.6931472
    %v678 = vlog2.pop %v647
    %v679 = vmul.f32 %v678, 0.6931472
    %v680 = vlog2.pop %v649
    %v681 = vmul.f32 %v680, 0.6931472
    %v682 = vlog2.pop %v651
    %v683 = vmul.f32 %v682, 0.6931472
    %v684 = vlog2.pop %v653
    %v685 = vmul.f32 %v684, 0.6931472
    %v686 = vlog2.pop %v655
    %v687 = vmul.f32 %v686, 0.6931472
    %v688 = vlog2.pop %v657
    %v689 = vmul.f32 %v688, 0.6931472
    %v690 = vlog2.pop %v659
    %v691 = vmul.f32 %v690, 0.6931472
    %v692 = vsub.f32 %v580, %v661
    %v693 = vsub.f32 %v581, %v663
    %v694 = vsub.f32 %v582, %v665
    %v695 = vsub.f32 %v583, %v667
    %v696 = vsub.f32 %v584, %v669
    %v697 = vsub.f32 %v585, %v671
    %v698 = vsub.f32 %v586, %v673
    %v699 = vsub.f32 %v587, %v675
    %v700 = vsub.f32 %v588, %v677
    %v701 = vsub.f32 %v589, %v679
    %v702 = vsub.f32 %v590, %v681
    %v703 = vsub.f32 %v591, %v683
    %v704 = vsub.f32 %v592, %v685
    %v705 = vsub.f32 %v593, %v687
    %v706 = vsub.f32 %v594, %v689
    %v707 = vsub.f32 %v595, %v691
    %708 = vst [vmem:[%s5] sm:$0xff] %v692
    %709 = vst [vmem:[%s5 + $0x8] sm:$0xff] %v693
    %710 = vst [vmem:[%s5 + $0x10] sm:$0xff] %v694
    %711 = vst [vmem:[%s5 + $0x18] sm:$0xff] %v695
    %712 = vst [vmem:[%s5 + $0x20] sm:$0xff] %v696
    %713 = vst [vmem:[%s5 + $0x28] sm:$0xff] %v697
    %714 = vst [vmem:[%s5 + $0x30] sm:$0xff] %v698
    %715 = vst [vmem:[%s5 + $0x38] sm:$0xff] %v699
    %716 = vst [vmem:[%s5 + $0x40] sm:$0xff] %v700
    %717 = vst [vmem:[%s5 + $0x48] sm:$0xff] %v701
    %718 = vst [vmem:[%s5 + $0x50] sm:$0xff] %v702
    %719 = vst [vmem:[%s5 + $0x58] sm:$0xff] %v703
    %720 = vst [vmem:[%s5 + $0x60] sm:$0xff] %v704
    %721 = vst [vmem:[%s5 + $0x68] sm:$0xff] %v705
    %722 = vst [vmem:[%s5 + $0x70] sm:$0xff] %v706
    %723 = vst [vmem:[%s5 + $0x78] sm:$0xff] %v707
  $region29: #{base_gnn_forward.3} parent=0 // pred_fallthru
    _
  // Predicated region
  $region30: #{base_gnn_forward.3} parent=0 // pred_check
    _
  $region31: #{base_gnn_forward.3} parent=0 // pred_check_branch
    %725 = sbr.rel (0) target = $region33
  $region32: #{base_gnn_forward.3} parent=0 // pred_region
    _
  $region33: #{base_gnn_forward.3} parent=0 // pred_fallthru
    _
  // Predicated region
  $region34: #{base_gnn_forward.3} parent=0 // pred_check
    _
  $region35: #{base_gnn_forward.3} parent=0 // pred_check_branch
    %727 = sbr.rel (0) target = $region37
  $region36: #{base_gnn_forward.3} parent=0 // pred_region
    _
  $region37: #{base_gnn_forward.3} parent=0 // pred_fallthru
    _

</llo_original>
